<compile_context>
chip_gen: v7x
topology: tpu7x:2x2x1
jax: 0.10.0
libtpu: 0.0.40
codegen_flags: <defaults>
</compile_context>

<pallas_src>
import functools

import jax
import jax.numpy as jnp
from jax.experimental import pallas as pl
from jax.experimental.pallas import tpu as pltpu


# Static activation pattern of FeatCAE (enc1, enc2, latent, dec1, dec2, out).
CAE_RELU = (True, True, False, True, True, False)


# ----------------------------------------------------------------------------
# Fused Pallas kernel: conv + ReLU + avg-pool + 6-layer FeatCAE
# ----------------------------------------------------------------------------

def _dfr_fused_kernel(x_ref, wconv_ref, bconv_ref, *refs, relu_flags, win):
    """One kernel body for the whole DFR forward on a row tile.

    x:     (tm, 2*Kp)       bf16 paired im2col patches
    wconv: (2*Kp, 2*Cout)   bf16 block-diagonal conv weight
    bconv: (1, 2*Cout)      f32 bias
    then n_layers CAE weights (bf16, block-diagonal), n_layers shifts (f32),
    ext_ref: (tm//win, 2*Cout) f32 pooled features      (lane-dense, 128 wide)
    rec_ref: (tm//win, 2*Cout) f32 reconstructed features
    relu_flags / win are STATIC (bound via functools.partial).
    """
    n_layers = len(relu_flags)
    w_refs = refs[:n_layers]
    s_refs = refs[n_layers:2 * n_layers]
    ext_ref = refs[2 * n_layers]
    rec_ref = refs[2 * n_layers + 1]

    # --- conv (as matmul on im2col rows) + bias + ReLU ---
    z = jnp.dot(x_ref[...], wconv_ref[...], preferred_element_type=jnp.float32)
    z = jnp.maximum(z + bconv_ref[...], 0.0)

    # --- mean over the 'win' window contributions of each pooled pixel ---
    tm, n = z.shape
    pooled = jnp.mean(z.reshape(tm // win, win, n), axis=1)   # f32
    ext_ref[...] = pooled.astype(ext_ref.dtype)

    # --- fused 6-layer FeatCAE; intermediates stay in vregs ---
    y = pooled
    for li in range(n_layers):
        y = jnp.dot(y.astype(jnp.bfloat16), w_refs[li][...],
                    preferred_element_type=jnp.float32)
        y = y + s_refs[li][...]
        if relu_flags[li]:                                    # static bool -> OK
            y = jnp.maximum(y, 0.0)
    rec_ref[...] = y.astype(rec_ref.dtype)


# ----------------------------------------------------------------------------
# pallas_call wrapper
# ----------------------------------------------------------------------------

def _pick_tile(m, max_tile, multiple):
    """Largest divisor of m that is a multiple of `multiple` and <= max_tile.

    Prefers >= 2 grid steps (v7x megacore). Falls back to the full extent
    (grid=1), which is always a legal block shape.
    """
    cands = [t for t in range(multiple, min(max_tile, m) + 1, multiple)
             if m % t == 0]
    if not cands:
        return m
    tm = max(cands)
    if tm == m and (m // 2) in cands:
        tm = m // 2
    return tm


def dfr_fused_call(xw, wconv, bconv, ws, ss, *, win, relu_flags, max_tile=2048):
    """Run the fused DFR kernel.

    xw:    (M, 2*Kp) bf16   paired im2col patches (M = num_pooled_pixels/2 * win)
    wconv: (2*Kp, 2*Cout) bf16, bconv: (1, 2*Cout) f32
    ws/ss: per-CAE-layer block-diag weights (bf16) / shifts (f32, (1, 2*cout))
    Returns (extracted, reconstructed): both (M // win, 2*Cout) f32, each row
    holding two adjacent pooled pixels side by side (128 lanes).
    """
    M, K2 = xw.shape
    _, N2 = wconv.shape
    n_layers = len(ws)
    assert n_layers == len(ss) == len(relu_flags)
    assert M % win == 0
    tm = _pick_tile(M, max_tile, win * 8)        # tm//win is a multiple of 8

    in_specs = [
        pl.BlockSpec((tm, K2), lambda i: (i, 0)),
        pl.BlockSpec((K2, N2), lambda i: (0, 0)),
        pl.BlockSpec((1, N2), lambda i: (0, 0)),
    ]
    for w in ws:
        in_specs.append(pl.BlockSpec(w.shape, lambda i: (0, 0)))
    for s in ss:
        in_specs.append(pl.BlockSpec(s.shape, lambda i: (0, 0)))

    n_out = ws[-1].shape[1]
    out_shape = (
        jax.ShapeDtypeStruct((M // win, N2), jnp.float32),
        jax.ShapeDtypeStruct((M // win, n_out), jnp.float32),
    )
    out_specs = [
        pl.BlockSpec((tm // win, N2), lambda i: (i, 0)),
        pl.BlockSpec((tm // win, n_out), lambda i: (i, 0)),
    ]

    kern = functools.partial(_dfr_fused_kernel,
                             relu_flags=tuple(relu_flags), win=win)
    return pl.pallas_call(
        kern,
        out_shape=out_shape,
        grid_spec=pltpu.PrefetchScalarGridSpec(
            num_scalar_prefetch=0,
            grid=(M // tm,),
            in_specs=in_specs,
            out_specs=out_specs,
        ),
        compiler_params=pltpu.CompilerParams(
            dimension_semantics=("parallel",)),
    )(xw, wconv, bconv, *ws, *ss)


# ----------------------------------------------------------------------------
# Layout glue (im2col, upsample/pool index fold, pixel pairing)
# ----------------------------------------------------------------------------

def _round_up(v, m):
    return -(-v // m) * m


def _pair_blockdiag(w):
    """(K, N) -> (2K, 2N) block-diagonal so paired rows stay independent."""
    K, N = w.shape
    z = jnp.zeros((K, N), w.dtype)
    top = jnp.concatenate([w, z], axis=1)
    bot = jnp.concatenate([z, w], axis=1)
    return jnp.concatenate([top, bot], axis=0)


def _im2col_3x3(x, k_padded):
    """x: (B, C, H, W), padding=1 -> (B*H*W, k_padded) bf16, PyTorch weight order."""
    B, C, H, W = x.shape
    xp = jnp.pad(x, ((0, 0), (0, 0), (1, 1), (1, 1)))
    cols = [xp[:, :, dy:dy + H, dx:dx + W] for dy in range(3) for dx in range(3)]
    p = jnp.stack(cols, axis=2)                              # (B, C, 9, H, W)
    p = p.transpose(0, 3, 4, 1, 2).reshape(B * H * W, C * 9)  # col = c*9 + dy*3 + dx
    pad = k_padded - C * 9
    if pad:
        p = jnp.pad(p, ((0, 0), (0, pad)))
    return p.astype(jnp.bfloat16)


def _window_source_index(B, H, W, featmap_size, kernel_size):
    """Flat source-pixel index for each (pooled pixel, window contribution).

    Folds nearest upsample (src = floor(i*in/out)) + non-overlapping pooling into
    one gather index, so the upsampled map is never materialized.
    Returns int32 array of shape (B*oh*ow*kh*kw,), ordered (b, oy, ox, dy, dx).
    """
    Fh, Fw = featmap_size
    kh, kw = kernel_size
    oh, ow = Fh // kh, Fw // kw
    sy = ((jnp.arange(Fh) * H) // Fh).reshape(oh, kh)
    sx = ((jnp.arange(Fw) * W) // Fw).reshape(ow, kw)
    src = sy[:, None, :, None] * W + sx[None, :, None, :]     # (oh, ow, kh, kw)
    src = src.reshape(1, oh * ow * kh * kw)
    src = src + (jnp.arange(B) * (H * W))[:, None]
    return src.reshape(-1).astype(jnp.int32)


# ----------------------------------------------------------------------------
# DFR forward
# ----------------------------------------------------------------------------

def dfr_forward(x, params, *, featmap_size, kernel_size=(4, 4), stride=(4, 4)):
    B, Cin, H, W = x.shape
    Fh, Fw = featmap_size
    kh, kw = kernel_size
    sh, sw = stride
    assert (kh, kw) == (sh, sw) and Fh % kh == 0 and Fw % kw == 0
    oh, ow = Fh // kh, Fw // kw
    win = kh * kw
    M_pool = B * oh * ow
    assert M_pool % 2 == 0, "pixel pairing needs an even number of pooled pixels"

    # --- pack conv params: pad K 27->32, pair via block-diag, cast to bf16 ---
    wc = params["extractor"]["conv_w"]                       # (Cout, Cin, 3, 3)
    bc = params["extractor"]["conv_b"]                       # (Cout,)
    Cout = wc.shape[0]
    K = Cin * 9
    Kp = _round_up(K, 32)
    wmat = jnp.zeros((Kp, Cout), jnp.float32).at[:K].set(wc.reshape(Cout, K).T)
    w2 = _pair_blockdiag(wmat).astype(jnp.bfloat16)          # (2*Kp, 2*Cout)
    b2 = jnp.concatenate([bc, bc]).reshape(1, 2 * Cout)      # (1, 2*Cout) f32

    # --- pack FeatCAE params (block-diag paired, bf16 weights, f32 shifts) ---
    ws, ss = [], []
    for layer in params["cae"]["layers"]:
        ws.append(_pair_blockdiag(layer["w"]).astype(jnp.bfloat16))
        ss.append(jnp.concatenate([layer["shift"], layer["shift"]]).reshape(1, -1))

    # --- im2col + (upsample o pool)-window gather, paired pooled-pixel layout ---
    patches = _im2col_3x3(x, Kp)                             # (B*H*W, Kp) bf16
    order = _window_source_index(B, H, W, featmap_size, kernel_size)
    xw = patches[order]                                      # (M_pool*win, Kp)
    xw = xw.reshape(M_pool // 2, 2, win, Kp).transpose(0, 2, 1, 3)
    xw = xw.reshape(M_pool // 2 * win, 2 * Kp)

    # --- single fused kernel: conv + ReLU + avg-pool + 6-layer FeatCAE ---
    pooled2, recon2 = dfr_fused_call(xw, w2, b2, ws, ss,
                                     win=win, relu_flags=CAE_RELU)

    # --- NCHW only at the module boundary ---
    extracted = pooled2.reshape(B, oh, ow, Cout).transpose(0, 3, 1, 2)
    reconstructed = recon2.reshape(B, oh, ow, Cout).transpose(0, 3, 1, 2)
    return extracted, reconstructed


# ----------------------------------------------------------------------------
# Pure-JAX reference (f32) for correctness checking
# ----------------------------------------------------------------------------

def dfr_reference(x, params, *, featmap_size, kernel_size=(4, 4)):
    B, Cin, H, W = x.shape
    wc = params["extractor"]["conv_w"]
    bc = params["extractor"]["conv_b"]
    feat = jax.lax.conv_general_dilated(
        x, wc, window_strides=(1, 1), padding=((1, 1), (1, 1)),
        dimension_numbers=("NCHW", "OIHW", "NCHW"),
        precision=jax.lax.Precision.HIGHEST)
    feat = jnp.maximum(feat + bc[None, :, None, None], 0.0)
    Fh, Fw = featmap_size
    ri = (jnp.arange(Fh) * H) // Fh
    ci = (jnp.arange(Fw) * W) // Fw
    feat = feat[:, :, ri[:, None], ci[None, :]]              # nearest upsample
    kh, kw = kernel_size
    oh, ow = Fh // kh, Fw // kw
    C = feat.shape[1]
    extracted = feat.reshape(B, C, oh, kh, ow, kw).mean(axis=(3, 5))
    y = extracted.transpose(0, 2, 3, 1).reshape(B * oh * ow, C)
    for layer, relu in zip(params["cae"]["layers"], CAE_RELU):
        y = jnp.dot(y, layer["w"], precision=jax.lax.Precision.HIGHEST)
        y = y + layer["shift"][None, :]
        if relu:
            y = jnp.maximum(y, 0.0)
    recon = y.reshape(B, oh, ow, -1).transpose(0, 3, 1, 2)
    return extracted, recon


# ----------------------------------------------------------------------------
# Deterministic parameter init (synthetic weights; BN folded in eval mode)
# ----------------------------------------------------------------------------

def init_params(key, *, img_channels=3, vgg_channels=64,
                in_channels=64, latent_dim=16, is_bn=True):
    keys = iter(jax.random.split(key, 64))
    eps = 1e-5

    ext = {
        "conv_w": jax.random.normal(next(keys), (vgg_channels, img_channels, 3, 3),
                                    jnp.float32) * 0.1,
        "conv_b": jax.random.normal(next(keys), (vgg_channels,), jnp.float32) * 0.1,
    }

    hid1 = (in_channels + 2 * latent_dim) // 2
    hid2 = 2 * latent_dim
    # (cin, cout, has_bn); relu pattern is the static CAE_RELU tuple.
    layer_defs = [
        (in_channels, hid1, True),
        (hid1, hid2, True),
        (hid2, latent_dim, False),
        (latent_dim, hid2, True),
        (hid2, hid1, True),
        (hid1, in_channels, False),
    ]
    layers = []
    for cin, cout, has_bn in layer_defs:
        w = jax.random.normal(next(keys), (cout, cin), jnp.float32) / jnp.sqrt(cin)
        b = jax.random.normal(next(keys), (cout,), jnp.float32) * 0.05
        if has_bn and is_bn:
            gamma = jnp.ones((cout,), jnp.float32)
            beta = jnp.zeros((cout,), jnp.float32)
            rmean = jax.random.normal(next(keys), (cout,), jnp.float32) * 0.05
            rvar = jnp.abs(
                jax.random.normal(next(keys), (cout,), jnp.float32)) * 0.1 + 1.0
            s = gamma / jnp.sqrt(rvar + eps)
            w = w * s[:, None]                   # fold BN scale into the weight
            shift = s * (b - rmean) + beta
        else:
            shift = b
        layers.append({"w": w.T, "shift": shift})  # w: (cin, cout) for x @ w
    return {"extractor": ext, "cae": {"layers": layers}}


# ----------------------------------------------------------------------------
# Main
# ----------------------------------------------------------------------------

if __name__ == "__main__":
    key = jax.random.PRNGKey(0)
    kx, kp = jax.random.split(key)

    B, Cimg, H, W = 2, 3, 32, 32          # small NCHW image input
    featmap_size = (32, 32)               # small stand-in for the 256x256 default
    in_channels = 64                      # relu1_1 channel count
    latent_dim = 16

    x = jax.random.normal(kx, (B, Cimg, H, W), jnp.float32)
    params = init_params(kp, img_channels=Cimg, vgg_channels=in_channels,
                         in_channels=in_channels, latent_dim=latent_dim,
                         is_bn=True)

    fwd = jax.jit(functools.partial(
        dfr_forward, featmap_size=featmap_size,
        kernel_size=(4, 4), stride=(4, 4)))

    extracted_feat, reconstructed_feat = fwd(x, params)
    jax.block_until_ready(extracted_feat)
    jax.block_until_ready(reconstructed_feat)

    oh, ow = featmap_size[0] // 4, featmap_size[1] // 4
    assert extracted_feat.shape == (B, in_channels, oh, ow), extracted_feat.shape
    assert reconstructed_feat.shape == (B, in_channels, oh, ow), reconstructed_feat.shape
    assert bool(jnp.all(jnp.isfinite(extracted_feat)))
    assert bool(jnp.all(jnp.isfinite(reconstructed_feat)))

    # Loose tolerance: Pallas path feeds the MXU with bf16 operands (f32 accum).
    ref_ex, ref_re = dfr_reference(x, params, featmap_size=featmap_size,
                                   kernel_size=(4, 4))
    assert bool(jnp.allclose(extracted_feat, ref_ex, rtol=1e-1, atol=1e-1))
    assert bool(jnp.allclose(reconstructed_feat, ref_re, rtol=1e-1, atol=1e-1))

    print("KERNEL_OK")
</pallas_src>

<mosaic_0001>
module attributes {stable_mosaic.version = 11 : i64} {
  func.func @_dfr_fused_kernel(%arg0: i32, %arg1: memref<512x64xbf16, #tpu.memory_space<vmem>>, %arg2: memref<64x128xbf16, #tpu.memory_space<vmem>>, %arg3: memref<1x128xf32, #tpu.memory_space<vmem>>, %arg4: memref<128x96xbf16, #tpu.memory_space<vmem>>, %arg5: memref<96x64xbf16, #tpu.memory_space<vmem>>, %arg6: memref<64x32xbf16, #tpu.memory_space<vmem>>, %arg7: memref<32x64xbf16, #tpu.memory_space<vmem>>, %arg8: memref<64x96xbf16, #tpu.memory_space<vmem>>, %arg9: memref<96x128xbf16, #tpu.memory_space<vmem>>, %arg10: memref<1x96xf32, #tpu.memory_space<vmem>>, %arg11: memref<1x64xf32, #tpu.memory_space<vmem>>, %arg12: memref<1x32xf32, #tpu.memory_space<vmem>>, %arg13: memref<1x64xf32, #tpu.memory_space<vmem>>, %arg14: memref<1x96xf32, #tpu.memory_space<vmem>>, %arg15: memref<1x128xf32, #tpu.memory_space<vmem>>, %arg16: memref<32x128xf32, #tpu.memory_space<vmem>>, %arg17: memref<32x128xf32, #tpu.memory_space<vmem>>) attributes {dimension_semantics = [#tpu.dimension_semantics<parallel>], iteration_bounds = array<i64: 2>, scalar_prefetch = 0 : i64, scratch_operands = 0 : i64, tpu.core_type = #tpu.core_type<tc>, window_params = [{transform_indices = @transform_0, window_bounds = array<i64: 512, 64>}, {pipeline_mode = #tpu.pipeline_mode<synchronous>, transform_indices = @transform_1, window_bounds = array<i64: 64, 128>}, {pipeline_mode = #tpu.pipeline_mode<synchronous>, transform_indices = @transform_2, window_bounds = array<i64: 1, 128>}, {pipeline_mode = #tpu.pipeline_mode<synchronous>, transform_indices = @transform_3, window_bounds = array<i64: 128, 96>}, {pipeline_mode = #tpu.pipeline_mode<synchronous>, transform_indices = @transform_4, window_bounds = array<i64: 96, 64>}, {pipeline_mode = #tpu.pipeline_mode<synchronous>, transform_indices = @transform_5, window_bounds = array<i64: 64, 32>}, {pipeline_mode = #tpu.pipeline_mode<synchronous>, transform_indices = @transform_6, window_bounds = array<i64: 32, 64>}, {pipeline_mode = #tpu.pipeline_mode<synchronous>, transform_indices = @transform_7, window_bounds = array<i64: 64, 96>}, {pipeline_mode = #tpu.pipeline_mode<synchronous>, transform_indices = @transform_8, window_bounds = array<i64: 96, 128>}, {pipeline_mode = #tpu.pipeline_mode<synchronous>, transform_indices = @transform_9, window_bounds = array<i64: 1, 96>}, {pipeline_mode = #tpu.pipeline_mode<synchronous>, transform_indices = @transform_10, window_bounds = array<i64: 1, 64>}, {pipeline_mode = #tpu.pipeline_mode<synchronous>, transform_indices = @transform_11, window_bounds = array<i64: 1, 32>}, {pipeline_mode = #tpu.pipeline_mode<synchronous>, transform_indices = @transform_12, window_bounds = array<i64: 1, 64>}, {pipeline_mode = #tpu.pipeline_mode<synchronous>, transform_indices = @transform_13, window_bounds = array<i64: 1, 96>}, {pipeline_mode = #tpu.pipeline_mode<synchronous>, transform_indices = @transform_14, window_bounds = array<i64: 1, 128>}, {transform_indices = @transform_15, window_bounds = array<i64: 32, 128>}, {transform_indices = @transform_16, window_bounds = array<i64: 32, 128>}]} {
    %c0 = arith.constant 0 : index
    %c0_0 = arith.constant 0 : index
    %0 = vector.load %arg1[%c0, %c0_0] : memref<512x64xbf16, #tpu.memory_space<vmem>>, vector<512x64xbf16>
    %c0_1 = arith.constant 0 : index
    %c0_2 = arith.constant 0 : index
    %1 = vector.load %arg2[%c0_1, %c0_2] : memref<64x128xbf16, #tpu.memory_space<vmem>>, vector<64x128xbf16>
    %cst = arith.constant dense<0.000000e+00> : vector<512x128xf32>
    %2 = tpu.matmul %0, %1, %cst {dimension_numbers = #tpu.dot_dimension_numbers<[1], [0], [0], [1], [0, 0, 1, 1], [], []>} : vector<512x64xbf16>, vector<64x128xbf16>, vector<512x128xf32> -> vector<512x128xf32>
    %c0_3 = arith.constant 0 : index
    %c0_4 = arith.constant 0 : index
    %3 = vector.load %arg3[%c0_3, %c0_4] : memref<1x128xf32, #tpu.memory_space<vmem>>, vector<1x128xf32>
    %4 = vector.broadcast %3 : vector<1x128xf32> to vector<512x128xf32>
    %5 = arith.addf %2, %4 : vector<512x128xf32>
    %cst_5 = arith.constant 0.000000e+00 : f32
    %6 = vector.broadcast %cst_5 : f32 to vector<512x128xf32>
    %7 = arith.maximumf %5, %6 : vector<512x128xf32>
    %8 = vector.shape_cast %7 : vector<512x128xf32> to vector<32x16x128xf32>
    %cst_6 = arith.constant dense<0.000000e+00> : vector<32x128xf32>
    %9 = vector.multi_reduction <add>, %8, %cst_6 [1] : vector<32x16x128xf32> to vector<32x128xf32>
    %cst_7 = arith.constant 1.600000e+01 : f32
    %10 = vector.broadcast %cst_7 : f32 to vector<32x128xf32>
    %11 = arith.divf %9, %10 : vector<32x128xf32>
    %c0_8 = arith.constant 0 : index
    %c0_9 = arith.constant 0 : index
    %12 = vector.load %arg16[%c0_8, %c0_9] : memref<32x128xf32, #tpu.memory_space<vmem>>, vector<32x128xf32>
    tpu.vector_store %arg16[%c0_8, %c0_9], %11 {strides = array<i32>} : memref<32x128xf32, #tpu.memory_space<vmem>>, vector<32x128xf32>,
    %13 = arith.truncf %11 : vector<32x128xf32> to vector<32x128xbf16>
    %c0_10 = arith.constant 0 : index
    %c0_11 = arith.constant 0 : index
    %14 = vector.load %arg4[%c0_10, %c0_11] : memref<128x96xbf16, #tpu.memory_space<vmem>>, vector<128x96xbf16>
    %cst_12 = arith.constant dense<0.000000e+00> : vector<32x96xf32>
    %15 = tpu.matmul %13, %14, %cst_12 {dimension_numbers = #tpu.dot_dimension_numbers<[1], [0], [0], [1], [0, 0, 1, 1], [], []>} : vector<32x128xbf16>, vector<128x96xbf16>, vector<32x96xf32> -> vector<32x96xf32>
    %c0_13 = arith.constant 0 : index
    %c0_14 = arith.constant 0 : index
    %16 = vector.load %arg10[%c0_13, %c0_14] : memref<1x96xf32, #tpu.memory_space<vmem>>, vector<1x96xf32>
    %17 = vector.broadcast %16 : vector<1x96xf32> to vector<32x96xf32>
    %18 = arith.addf %15, %17 : vector<32x96xf32>
    %cst_15 = arith.constant 0.000000e+00 : f32
    %19 = vector.broadcast %cst_15 : f32 to vector<32x96xf32>
    %20 = arith.maximumf %18, %19 : vector<32x96xf32>
    %21 = arith.truncf %20 : vector<32x96xf32> to vector<32x96xbf16>
    %c0_16 = arith.constant 0 : index
    %c0_17 = arith.constant 0 : index
    %22 = vector.load %arg5[%c0_16, %c0_17] : memref<96x64xbf16, #tpu.memory_space<vmem>>, vector<96x64xbf16>
    %cst_18 = arith.constant dense<0.000000e+00> : vector<32x64xf32>
    %23 = tpu.matmul %21, %22, %cst_18 {dimension_numbers = #tpu.dot_dimension_numbers<[1], [0], [0], [1], [0, 0, 1, 1], [], []>} : vector<32x96xbf16>, vector<96x64xbf16>, vector<32x64xf32> -> vector<32x64xf32>
    %c0_19 = arith.constant 0 : index
    %c0_20 = arith.constant 0 : index
    %24 = vector.load %arg11[%c0_19, %c0_20] : memref<1x64xf32, #tpu.memory_space<vmem>>, vector<1x64xf32>
    %25 = vector.broadcast %24 : vector<1x64xf32> to vector<32x64xf32>
    %26 = arith.addf %23, %25 : vector<32x64xf32>
    %cst_21 = arith.constant 0.000000e+00 : f32
    %27 = vector.broadcast %cst_21 : f32 to vector<32x64xf32>
    %28 = arith.maximumf %26, %27 : vector<32x64xf32>
    %29 = arith.truncf %28 : vector<32x64xf32> to vector<32x64xbf16>
    %c0_22 = arith.constant 0 : index
    %c0_23 = arith.constant 0 : index
    %30 = vector.load %arg6[%c0_22, %c0_23] : memref<64x32xbf16, #tpu.memory_space<vmem>>, vector<64x32xbf16>
    %cst_24 = arith.constant dense<0.000000e+00> : vector<32x32xf32>
    %31 = tpu.matmul %29, %30, %cst_24 {dimension_numbers = #tpu.dot_dimension_numbers<[1], [0], [0], [1], [0, 0, 1, 1], [], []>} : vector<32x64xbf16>, vector<64x32xbf16>, vector<32x32xf32> -> vector<32x32xf32>
    %c0_25 = arith.constant 0 : index
    %c0_26 = arith.constant 0 : index
    %32 = vector.load %arg12[%c0_25, %c0_26] : memref<1x32xf32, #tpu.memory_space<vmem>>, vector<1x32xf32>
    %33 = vector.broadcast %32 : vector<1x32xf32> to vector<32x32xf32>
    %34 = arith.addf %31, %33 : vector<32x32xf32>
    %35 = arith.truncf %34 : vector<32x32xf32> to vector<32x32xbf16>
    %c0_27 = arith.constant 0 : index
    %c0_28 = arith.constant 0 : index
    %36 = vector.load %arg7[%c0_27, %c0_28] : memref<32x64xbf16, #tpu.memory_space<vmem>>, vector<32x64xbf16>
    %cst_29 = arith.constant dense<0.000000e+00> : vector<32x64xf32>
    %37 = tpu.matmul %35, %36, %cst_29 {dimension_numbers = #tpu.dot_dimension_numbers<[1], [0], [0], [1], [0, 0, 1, 1], [], []>} : vector<32x32xbf16>, vector<32x64xbf16>, vector<32x64xf32> -> vector<32x64xf32>
    %c0_30 = arith.constant 0 : index
    %c0_31 = arith.constant 0 : index
    %38 = vector.load %arg13[%c0_30, %c0_31] : memref<1x64xf32, #tpu.memory_space<vmem>>, vector<1x64xf32>
    %39 = vector.broadcast %38 : vector<1x64xf32> to vector<32x64xf32>
    %40 = arith.addf %37, %39 : vector<32x64xf32>
    %cst_32 = arith.constant 0.000000e+00 : f32
    %41 = vector.broadcast %cst_32 : f32 to vector<32x64xf32>
    %42 = arith.maximumf %40, %41 : vector<32x64xf32>
    %43 = arith.truncf %42 : vector<32x64xf32> to vector<32x64xbf16>
    %c0_33 = arith.constant 0 : index
    %c0_34 = arith.constant 0 : index
    %44 = vector.load %arg8[%c0_33, %c0_34] : memref<64x96xbf16, #tpu.memory_space<vmem>>, vector<64x96xbf16>
    %cst_35 = arith.constant dense<0.000000e+00> : vector<32x96xf32>
    %45 = tpu.matmul %43, %44, %cst_35 {dimension_numbers = #tpu.dot_dimension_numbers<[1], [0], [0], [1], [0, 0, 1, 1], [], []>} : vector<32x64xbf16>, vector<64x96xbf16>, vector<32x96xf32> -> vector<32x96xf32>
    %c0_36 = arith.constant 0 : index
    %c0_37 = arith.constant 0 : index
    %46 = vector.load %arg14[%c0_36, %c0_37] : memref<1x96xf32, #tpu.memory_space<vmem>>, vector<1x96xf32>
    %47 = vector.broadcast %46 : vector<1x96xf32> to vector<32x96xf32>
    %48 = arith.addf %45, %47 : vector<32x96xf32>
    %cst_38 = arith.constant 0.000000e+00 : f32
    %49 = vector.broadcast %cst_38 : f32 to vector<32x96xf32>
    %50 = arith.maximumf %48, %49 : vector<32x96xf32>
    %51 = arith.truncf %50 : vector<32x96xf32> to vector<32x96xbf16>
    %c0_39 = arith.constant 0 : index
    %c0_40 = arith.constant 0 : index
    %52 = vector.load %arg9[%c0_39, %c0_40] : memref<96x128xbf16, #tpu.memory_space<vmem>>, vector<96x128xbf16>
    %cst_41 = arith.constant dense<0.000000e+00> : vector<32x128xf32>
    %53 = tpu.matmul %51, %52, %cst_41 {dimension_numbers = #tpu.dot_dimension_numbers<[1], [0], [0], [1], [0, 0, 1, 1], [], []>} : vector<32x96xbf16>, vector<96x128xbf16>, vector<32x128xf32> -> vector<32x128xf32>
    %c0_42 = arith.constant 0 : index
    %c0_43 = arith.constant 0 : index
    %54 = vector.load %arg15[%c0_42, %c0_43] : memref<1x128xf32, #tpu.memory_space<vmem>>, vector<1x128xf32>
    %55 = vector.broadcast %54 : vector<1x128xf32> to vector<32x128xf32>
    %56 = arith.addf %53, %55 : vector<32x128xf32>
    %c0_44 = arith.constant 0 : index
    %c0_45 = arith.constant 0 : index
    %57 = vector.load %arg17[%c0_44, %c0_45] : memref<32x128xf32, #tpu.memory_space<vmem>>, vector<32x128xf32>
    tpu.vector_store %arg17[%c0_44, %c0_45], %56 {strides = array<i32>} : memref<32x128xf32, #tpu.memory_space<vmem>>, vector<32x128xf32>,
    return
  }
  func.func @transform_0(%arg0: i32) -> (i32, i32) {
    %c0_i32 = arith.constant 0 : i32
    %c0_i32_0 = arith.constant 0 : i32
    return %arg0, %c0_i32 : i32, i32
  }
  func.func @transform_1(%arg0: i32) -> (i32, i32) {
    %c0_i32 = arith.constant 0 : i32
    %c0_i32_0 = arith.constant 0 : i32
    %c0_i32_1 = arith.constant 0 : i32
    return %c0_i32, %c0_i32_0 : i32, i32
  }
  func.func @transform_2(%arg0: i32) -> (i32, i32) {
    %c0_i32 = arith.constant 0 : i32
    %c0_i32_0 = arith.constant 0 : i32
    %c0_i32_1 = arith.constant 0 : i32
    return %c0_i32, %c0_i32_0 : i32, i32
  }
  func.func @transform_3(%arg0: i32) -> (i32, i32) {
    %c0_i32 = arith.constant 0 : i32
    %c0_i32_0 = arith.constant 0 : i32
    %c0_i32_1 = arith.constant 0 : i32
    return %c0_i32, %c0_i32_0 : i32, i32
  }
  func.func @transform_4(%arg0: i32) -> (i32, i32) {
    %c0_i32 = arith.constant 0 : i32
    %c0_i32_0 = arith.constant 0 : i32
    %c0_i32_1 = arith.constant 0 : i32
    return %c0_i32, %c0_i32_0 : i32, i32
  }
  func.func @transform_5(%arg0: i32) -> (i32, i32) {
    %c0_i32 = arith.constant 0 : i32
    %c0_i32_0 = arith.constant 0 : i32
    %c0_i32_1 = arith.constant 0 : i32
    return %c0_i32, %c0_i32_0 : i32, i32
  }
  func.func @transform_6(%arg0: i32) -> (i32, i32) {
    %c0_i32 = arith.constant 0 : i32
    %c0_i32_0 = arith.constant 0 : i32
    %c0_i32_1 = arith.constant 0 : i32
    return %c0_i32, %c0_i32_0 : i32, i32
  }
  func.func @transform_7(%arg0: i32) -> (i32, i32) {
    %c0_i32 = arith.constant 0 : i32
    %c0_i32_0 = arith.constant 0 : i32
    %c0_i32_1 = arith.constant 0 : i32
    return %c0_i32, %c0_i32_0 : i32, i32
  }
  func.func @transform_8(%arg0: i32) -> (i32, i32) {
    %c0_i32 = arith.constant 0 : i32
    %c0_i32_0 = arith.constant 0 : i32
    %c0_i32_1 = arith.constant 0 : i32
    return %c0_i32, %c0_i32_0 : i32, i32
  }
  func.func @transform_9(%arg0: i32) -> (i32, i32) {
    %c0_i32 = arith.constant 0 : i32
    %c0_i32_0 = arith.constant 0 : i32
    %c0_i32_1 = arith.constant 0 : i32
    return %c0_i32, %c0_i32_0 : i32, i32
  }
  func.func @transform_10(%arg0: i32) -> (i32, i32) {
    %c0_i32 = arith.constant 0 : i32
    %c0_i32_0 = arith.constant 0 : i32
    %c0_i32_1 = arith.constant 0 : i32
    return %c0_i32, %c0_i32_0 : i32, i32
  }
  func.func @transform_11(%arg0: i32) -> (i32, i32) {
    %c0_i32 = arith.constant 0 : i32
    %c0_i32_0 = arith.constant 0 : i32
    %c0_i32_1 = arith.constant 0 : i32
    return %c0_i32, %c0_i32_0 : i32, i32
  }
  func.func @transform_12(%arg0: i32) -> (i32, i32) {
    %c0_i32 = arith.constant 0 : i32
    %c0_i32_0 = arith.constant 0 : i32
    %c0_i32_1 = arith.constant 0 : i32
    return %c0_i32, %c0_i32_0 : i32, i32
  }
  func.func @transform_13(%arg0: i32) -> (i32, i32) {
    %c0_i32 = arith.constant 0 : i32
    %c0_i32_0 = arith.constant 0 : i32
    %c0_i32_1 = arith.constant 0 : i32
    return %c0_i32, %c0_i32_0 : i32, i32
  }
  func.func @transform_14(%arg0: i32) -> (i32, i32) {
    %c0_i32 = arith.constant 0 : i32
    %c0_i32_0 = arith.constant 0 : i32
    %c0_i32_1 = arith.constant 0 : i32
    return %c0_i32, %c0_i32_0 : i32, i32
  }
  func.func @transform_15(%arg0: i32) -> (i32, i32) {
    %c0_i32 = arith.constant 0 : i32
    %c0_i32_0 = arith.constant 0 : i32
    return %arg0, %c0_i32 : i32, i32
  }
  func.func @transform_16(%arg0: i32) -> (i32, i32) {
    %c0_i32 = arith.constant 0 : i32
    %c0_i32_0 = arith.constant 0 : i32
    return %arg0, %c0_i32 : i32, i32
  }
}

</mosaic_0001>

<llo_original>
// kernel: dfr_forward.1
$region0: #{dfr_forward.1}
  #allocation0 [shape = 'u32[]', space=smem, size = 0x4, offset = 0x4, fixed_abs, tag = 'smem constant byte address 0x4 - core index']
  #allocation1 [shape = 'u32[144,128]{1,0:T(1,128)}', space=vmem, size = 0x12000, scoped, tag = 'internal scratch']
  %s0 = inlined_call_operand.vmem [shape: bf16[1024,64], index: 0, kind: input, shape index: {}]
  %s1 = inlined_call_operand.vmem [shape: bf16[64,128], index: 1, kind: input, shape index: {}]
  %s2 = inlined_call_operand.vmem [shape: f32[1,128], index: 2, kind: input, shape index: {}]
  %s3 = inlined_call_operand.vmem [shape: bf16[128,96], index: 3, kind: input, shape index: {}]
  %s4 = inlined_call_operand.vmem [shape: bf16[96,64], index: 4, kind: input, shape index: {}]
  %s5 = inlined_call_operand.vmem [shape: bf16[64,32], index: 5, kind: input, shape index: {}]
  %s6 = inlined_call_operand.vmem [shape: bf16[32,64], index: 6, kind: input, shape index: {}]
  %s7 = inlined_call_operand.vmem [shape: bf16[64,96], index: 7, kind: input, shape index: {}]
  %s8 = inlined_call_operand.vmem [shape: bf16[96,128], index: 8, kind: input, shape index: {}]
  %s9 = inlined_call_operand.vmem [shape: f32[1,96], index: 9, kind: input, shape index: {}]
  %s10 = inlined_call_operand.vmem [shape: f32[1,64], index: 10, kind: input, shape index: {}]
  %s11 = inlined_call_operand.vmem [shape: f32[1,32], index: 11, kind: input, shape index: {}]
  %s12 = inlined_call_operand.vmem [shape: f32[1,64], index: 12, kind: input, shape index: {}]
  %s13 = inlined_call_operand.vmem [shape: f32[1,96], index: 13, kind: input, shape index: {}]
  %s14 = inlined_call_operand.vmem [shape: f32[1,128], index: 14, kind: input, shape index: {}]
  %s15 = inlined_call_operand.vmem [shape: f32[64,128], index: 15, kind: output, shape index: {0}]
  %s16 = inlined_call_operand.vmem [shape: f32[64,128], index: 16, kind: output, shape index: {1}]
  %17 = xla_tuple %s15, %s16
  %s18 = sld [smem:[#allocation0]]
  $region101: #{dfr_forward.1} parent=0
    _
  %s20 = ssub.s32 1, %s18
  %s21 = scalar_select 0, %s20, %s18
  loop: start=0, step=1, limit=4
  $region2: #{dfr_forward.1} parent=0 // loop_pre_header
    _
  $region3: #{dfr_forward.1} parent=0 // loop_header
    %s23 = sphi 0, %s27
    %p24 = scmp.ge.s32.totalorder %s23, 4
    %s33 = sphi 0, %s35
    %s36 = sphi 0, %s33
    %s37 = sphi 0, %s36
    %s53 = sphi 0, %s37
    %s57 = sphi 0, %s57
    %s59 = sphi 0, %s57
    %s60 = sphi 0, %s59
    %s74 = sphi 0, %s60
    %s78 = sphi 0, %s78
    %s80 = sphi 0, %s78
    %s81 = sphi 0, %s80
    %s95 = sphi 0, %s81
    %s99 = sphi 0, %s99
    %s101 = sphi 0, %s99
    %s102 = sphi 0, %s101
    %s116 = sphi 0, %s102
    %s120 = sphi 0, %s120
    %s122 = sphi 0, %s120
    %s123 = sphi 0, %s122
    %s137 = sphi 0, %s123
    %s141 = sphi 0, %s141
    %s143 = sphi 0, %s141
    %s144 = sphi 0, %s143
    %s158 = sphi 0, %s144
    %s162 = sphi 0, %s162
    %s164 = sphi 0, %s162
    %s165 = sphi 0, %s164
    %s179 = sphi 0, %s165
    %s183 = sphi 0, %s183
    %s185 = sphi 0, %s183
    %s186 = sphi 0, %s185
    %s200 = sphi 0, %s186
    %s204 = sphi 0, %s204
    %s206 = sphi 0, %s204
    %s207 = sphi 0, %s206
    %s221 = sphi 0, %s207
    %s225 = sphi 0, %s225
    %s227 = sphi 0, %s225
    %s228 = sphi 0, %s227
    %s242 = sphi 0, %s228
    %s246 = sphi 0, %s246
    %s248 = sphi 0, %s246
    %s249 = sphi 0, %s248
    %s263 = sphi 0, %s249
    %s267 = sphi 0, %s267
    %s269 = sphi 0, %s267
    %s270 = sphi 0, %s269
    %s284 = sphi 0, %s270
    %s288 = sphi 0, %s288
    %s290 = sphi 0, %s288
    %s291 = sphi 0, %s290
    %s305 = sphi 0, %s291
    %s309 = sphi 0, %s309
    %s311 = sphi 0, %s309
    %s312 = sphi 0, %s311
    %s326 = sphi 0, %s312
    %s330 = sphi 0, %s330
    %s332 = sphi 0, %s330
    %s333 = sphi 0, %s332
    %s347 = sphi 0, %s333
    %s353 = sphi 0, %s355
    %s356 = sphi 0, %s353
    %s357 = sphi 0, %s356
    %s373 = sphi 0, %s357
    %s379 = sphi 0, %s381
    %s382 = sphi 0, %s379
    %s383 = sphi 0, %s382
    %s399 = sphi 0, %s383
  $region4: #{dfr_forward.1} parent=0 // loop_header_branch
    %26 = sbr.rel (%p24) target = $region8
  $region5: #{dfr_forward.1} parent=0 // loop_body
    %s28 = ssub.s32 %s23, 1
    %s29 = ssub.s32 %s23, 2
    %s30 = sadd.s32 %s23, 1
    %s31 = ssub.s32 %s23, %s30
    %p32 = scmp.eq.s32.totalorder %s31, 0
    %s34 = sadd.s32 %s33, 1
    %s35 = scalar_select %p32, %s33, %s34
    %p38 = pneg %p32
    %p39 = scmp.eq.s32.totalorder %s23, 1
    %p40 = por %p38, %p39
    %p41 = scmp.ne.s32.totalorder %s33, %s36
    %p42 = scmp.eq.s32.totalorder %s23, 0
    %p43 = por %p41, %p42
    %p44 = scmp.ne.s32.totalorder %s33, %s36
    %p45 = scmp.eq.s32.totalorder %s28, 1
    %p46 = por %p44, %p45
    %p47 = scmp.ne.s32.totalorder %s36, %s37
    %p48 = scmp.eq.s32.totalorder %s28, 0
    %p49 = por %p47, %p48
    %p50 = scmp.ne.s32.totalorder %s36, %s37
    %p51 = scmp.eq.s32.totalorder %s29, 1
    %p52 = por %p50, %p51
    %p54 = scmp.ne.s32.totalorder %s37, %s53
    %p55 = scmp.eq.s32.totalorder %s29, 0
    %p56 = por %p54, %p55
    %s58 = sadd.s32 %s57, 1
    %p61 = scmp.eq.s32.totalorder %s23, 1
    %p62 = scmp.ne.s32.totalorder %s57, %s59
    %p63 = scmp.eq.s32.totalorder %s23, 0
    %p64 = por %p62, %p63
    %p65 = scmp.ne.s32.totalorder %s57, %s59
    %p66 = scmp.eq.s32.totalorder %s28, 1
    %p67 = por %p65, %p66
    %p68 = scmp.ne.s32.totalorder %s59, %s60
    %p69 = scmp.eq.s32.totalorder %s28, 0
    %p70 = por %p68, %p69
    %p71 = scmp.ne.s32.totalorder %s59, %s60
    %p72 = scmp.eq.s32.totalorder %s29, 1
    %p73 = por %p71, %p72
    %p75 = scmp.ne.s32.totalorder %s60, %s74
    %p76 = scmp.eq.s32.totalorder %s29, 0
    %p77 = por %p75, %p76
    %s79 = sadd.s32 %s78, 1
    %p82 = scmp.eq.s32.totalorder %s23, 1
    %p83 = scmp.ne.s32.totalorder %s78, %s80
    %p84 = scmp.eq.s32.totalorder %s23, 0
    %p85 = por %p83, %p84
    %p86 = scmp.ne.s32.totalorder %s78, %s80
    %p87 = scmp.eq.s32.totalorder %s28, 1
    %p88 = por %p86, %p87
    %p89 = scmp.ne.s32.totalorder %s80, %s81
    %p90 = scmp.eq.s32.totalorder %s28, 0
    %p91 = por %p89, %p90
    %p92 = scmp.ne.s32.totalorder %s80, %s81
    %p93 = scmp.eq.s32.totalorder %s29, 1
    %p94 = por %p92, %p93
    %p96 = scmp.ne.s32.totalorder %s81, %s95
    %p97 = scmp.eq.s32.totalorder %s29, 0
    %p98 = por %p96, %p97
    %s100 = sadd.s32 %s99, 1
    %p103 = scmp.eq.s32.totalorder %s23, 1
    %p104 = scmp.ne.s32.totalorder %s99, %s101
    %p105 = scmp.eq.s32.totalorder %s23, 0
    %p106 = por %p104, %p105
    %p107 = scmp.ne.s32.totalorder %s99, %s101
    %p108 = scmp.eq.s32.totalorder %s28, 1
    %p109 = por %p107, %p108
    %p110 = scmp.ne.s32.totalorder %s101, %s102
    %p111 = scmp.eq.s32.totalorder %s28, 0
    %p112 = por %p110, %p111
    %p113 = scmp.ne.s32.totalorder %s101, %s102
    %p114 = scmp.eq.s32.totalorder %s29, 1
    %p115 = por %p113, %p114
    %p117 = scmp.ne.s32.totalorder %s102, %s116
    %p118 = scmp.eq.s32.totalorder %s29, 0
    %p119 = por %p117, %p118
    %s121 = sadd.s32 %s120, 1
    %p124 = scmp.eq.s32.totalorder %s23, 1
    %p125 = scmp.ne.s32.totalorder %s120, %s122
    %p126 = scmp.eq.s32.totalorder %s23, 0
    %p127 = por %p125, %p126
    %p128 = scmp.ne.s32.totalorder %s120, %s122
    %p129 = scmp.eq.s32.totalorder %s28, 1
    %p130 = por %p128, %p129
    %p131 = scmp.ne.s32.totalorder %s122, %s123
    %p132 = scmp.eq.s32.totalorder %s28, 0
    %p133 = por %p131, %p132
    %p134 = scmp.ne.s32.totalorder %s122, %s123
    %p135 = scmp.eq.s32.totalorder %s29, 1
    %p136 = por %p134, %p135
    %p138 = scmp.ne.s32.totalorder %s123, %s137
    %p139 = scmp.eq.s32.totalorder %s29, 0
    %p140 = por %p138, %p139
    %s142 = sadd.s32 %s141, 1
    %p145 = scmp.eq.s32.totalorder %s23, 1
    %p146 = scmp.ne.s32.totalorder %s141, %s143
    %p147 = scmp.eq.s32.totalorder %s23, 0
    %p148 = por %p146, %p147
    %p149 = scmp.ne.s32.totalorder %s141, %s143
    %p150 = scmp.eq.s32.totalorder %s28, 1
    %p151 = por %p149, %p150
    %p152 = scmp.ne.s32.totalorder %s143, %s144
    %p153 = scmp.eq.s32.totalorder %s28, 0
    %p154 = por %p152, %p153
    %p155 = scmp.ne.s32.totalorder %s143, %s144
    %p156 = scmp.eq.s32.totalorder %s29, 1
    %p157 = por %p155, %p156
    %p159 = scmp.ne.s32.totalorder %s144, %s158
    %p160 = scmp.eq.s32.totalorder %s29, 0
    %p161 = por %p159, %p160
    %s163 = sadd.s32 %s162, 1
    %p166 = scmp.eq.s32.totalorder %s23, 1
    %p167 = scmp.ne.s32.totalorder %s162, %s164
    %p168 = scmp.eq.s32.totalorder %s23, 0
    %p169 = por %p167, %p168
    %p170 = scmp.ne.s32.totalorder %s162, %s164
    %p171 = scmp.eq.s32.totalorder %s28, 1
    %p172 = por %p170, %p171
    %p173 = scmp.ne.s32.totalorder %s164, %s165
    %p174 = scmp.eq.s32.totalorder %s28, 0
    %p175 = por %p173, %p174
    %p176 = scmp.ne.s32.totalorder %s164, %s165
    %p177 = scmp.eq.s32.totalorder %s29, 1
    %p178 = por %p176, %p177
    %p180 = scmp.ne.s32.totalorder %s165, %s179
    %p181 = scmp.eq.s32.totalorder %s29, 0
    %p182 = por %p180, %p181
    %s184 = sadd.s32 %s183, 1
    %p187 = scmp.eq.s32.totalorder %s23, 1
    %p188 = scmp.ne.s32.totalorder %s183, %s185
    %p189 = scmp.eq.s32.totalorder %s23, 0
    %p190 = por %p188, %p189
    %p191 = scmp.ne.s32.totalorder %s183, %s185
    %p192 = scmp.eq.s32.totalorder %s28, 1
    %p193 = por %p191, %p192
    %p194 = scmp.ne.s32.totalorder %s185, %s186
    %p195 = scmp.eq.s32.totalorder %s28, 0
    %p196 = por %p194, %p195
    %p197 = scmp.ne.s32.totalorder %s185, %s186
    %p198 = scmp.eq.s32.totalorder %s29, 1
    %p199 = por %p197, %p198
    %p201 = scmp.ne.s32.totalorder %s186, %s200
    %p202 = scmp.eq.s32.totalorder %s29, 0
    %p203 = por %p201, %p202
    %s205 = sadd.s32 %s204, 1
    %p208 = scmp.eq.s32.totalorder %s23, 1
    %p209 = scmp.ne.s32.totalorder %s204, %s206
    %p210 = scmp.eq.s32.totalorder %s23, 0
    %p211 = por %p209, %p210
    %p212 = scmp.ne.s32.totalorder %s204, %s206
    %p213 = scmp.eq.s32.totalorder %s28, 1
    %p214 = por %p212, %p213
    %p215 = scmp.ne.s32.totalorder %s206, %s207
    %p216 = scmp.eq.s32.totalorder %s28, 0
    %p217 = por %p215, %p216
    %p218 = scmp.ne.s32.totalorder %s206, %s207
    %p219 = scmp.eq.s32.totalorder %s29, 1
    %p220 = por %p218, %p219
    %p222 = scmp.ne.s32.totalorder %s207, %s221
    %p223 = scmp.eq.s32.totalorder %s29, 0
    %p224 = por %p222, %p223
    %s226 = sadd.s32 %s225, 1
    %p229 = scmp.eq.s32.totalorder %s23, 1
    %p230 = scmp.ne.s32.totalorder %s225, %s227
    %p231 = scmp.eq.s32.totalorder %s23, 0
    %p232 = por %p230, %p231
    %p233 = scmp.ne.s32.totalorder %s225, %s227
    %p234 = scmp.eq.s32.totalorder %s28, 1
    %p235 = por %p233, %p234
    %p236 = scmp.ne.s32.totalorder %s227, %s228
    %p237 = scmp.eq.s32.totalorder %s28, 0
    %p238 = por %p236, %p237
    %p239 = scmp.ne.s32.totalorder %s227, %s228
    %p240 = scmp.eq.s32.totalorder %s29, 1
    %p241 = por %p239, %p240
    %p243 = scmp.ne.s32.totalorder %s228, %s242
    %p244 = scmp.eq.s32.totalorder %s29, 0
    %p245 = por %p243, %p244
    %s247 = sadd.s32 %s246, 1
    %p250 = scmp.eq.s32.totalorder %s23, 1
    %p251 = scmp.ne.s32.totalorder %s246, %s248
    %p252 = scmp.eq.s32.totalorder %s23, 0
    %p253 = por %p251, %p252
    %p254 = scmp.ne.s32.totalorder %s246, %s248
    %p255 = scmp.eq.s32.totalorder %s28, 1
    %p256 = por %p254, %p255
    %p257 = scmp.ne.s32.totalorder %s248, %s249
    %p258 = scmp.eq.s32.totalorder %s28, 0
    %p259 = por %p257, %p258
    %p260 = scmp.ne.s32.totalorder %s248, %s249
    %p261 = scmp.eq.s32.totalorder %s29, 1
    %p262 = por %p260, %p261
    %p264 = scmp.ne.s32.totalorder %s249, %s263
    %p265 = scmp.eq.s32.totalorder %s29, 0
    %p266 = por %p264, %p265
    %s268 = sadd.s32 %s267, 1
    %p271 = scmp.eq.s32.totalorder %s23, 1
    %p272 = scmp.ne.s32.totalorder %s267, %s269
    %p273 = scmp.eq.s32.totalorder %s23, 0
    %p274 = por %p272, %p273
    %p275 = scmp.ne.s32.totalorder %s267, %s269
    %p276 = scmp.eq.s32.totalorder %s28, 1
    %p277 = por %p275, %p276
    %p278 = scmp.ne.s32.totalorder %s269, %s270
    %p279 = scmp.eq.s32.totalorder %s28, 0
    %p280 = por %p278, %p279
    %p281 = scmp.ne.s32.totalorder %s269, %s270
    %p282 = scmp.eq.s32.totalorder %s29, 1
    %p283 = por %p281, %p282
    %p285 = scmp.ne.s32.totalorder %s270, %s284
    %p286 = scmp.eq.s32.totalorder %s29, 0
    %p287 = por %p285, %p286
    %s289 = sadd.s32 %s288, 1
    %p292 = scmp.eq.s32.totalorder %s23, 1
    %p293 = scmp.ne.s32.totalorder %s288, %s290
    %p294 = scmp.eq.s32.totalorder %s23, 0
    %p295 = por %p293, %p294
    %p296 = scmp.ne.s32.totalorder %s288, %s290
    %p297 = scmp.eq.s32.totalorder %s28, 1
    %p298 = por %p296, %p297
    %p299 = scmp.ne.s32.totalorder %s290, %s291
    %p300 = scmp.eq.s32.totalorder %s28, 0
    %p301 = por %p299, %p300
    %p302 = scmp.ne.s32.totalorder %s290, %s291
    %p303 = scmp.eq.s32.totalorder %s29, 1
    %p304 = por %p302, %p303
    %p306 = scmp.ne.s32.totalorder %s291, %s305
    %p307 = scmp.eq.s32.totalorder %s29, 0
    %p308 = por %p306, %p307
    %s310 = sadd.s32 %s309, 1
    %p313 = scmp.eq.s32.totalorder %s23, 1
    %p314 = scmp.ne.s32.totalorder %s309, %s311
    %p315 = scmp.eq.s32.totalorder %s23, 0
    %p316 = por %p314, %p315
    %p317 = scmp.ne.s32.totalorder %s309, %s311
    %p318 = scmp.eq.s32.totalorder %s28, 1
    %p319 = por %p317, %p318
    %p320 = scmp.ne.s32.totalorder %s311, %s312
    %p321 = scmp.eq.s32.totalorder %s28, 0
    %p322 = por %p320, %p321
    %p323 = scmp.ne.s32.totalorder %s311, %s312
    %p324 = scmp.eq.s32.totalorder %s29, 1
    %p325 = por %p323, %p324
    %p327 = scmp.ne.s32.totalorder %s312, %s326
    %p328 = scmp.eq.s32.totalorder %s29, 0
    %p329 = por %p327, %p328
    %s331 = sadd.s32 %s330, 1
    %p334 = scmp.eq.s32.totalorder %s23, 1
    %p335 = scmp.ne.s32.totalorder %s330, %s332
    %p336 = scmp.eq.s32.totalorder %s23, 0
    %p337 = por %p335, %p336
    %p338 = scmp.ne.s32.totalorder %s330, %s332
    %p339 = scmp.eq.s32.totalorder %s28, 1
    %p340 = por %p338, %p339
    %p341 = scmp.ne.s32.totalorder %s332, %s333
    %p342 = scmp.eq.s32.totalorder %s28, 0
    %p343 = por %p341, %p342
    %p344 = scmp.ne.s32.totalorder %s332, %s333
    %p345 = scmp.eq.s32.totalorder %s29, 1
    %p346 = por %p344, %p345
    %p348 = scmp.ne.s32.totalorder %s333, %s347
    %p349 = scmp.eq.s32.totalorder %s29, 0
    %p350 = por %p348, %p349
    %s351 = ssub.s32 %s23, %s30
    %p352 = scmp.eq.s32.totalorder %s351, 0
    %s354 = sadd.s32 %s353, 1
    %s355 = scalar_select %p352, %s353, %s354
    %p358 = pneg %p352
    %p359 = scmp.eq.s32.totalorder %s23, 1
    %p360 = por %p358, %p359
    %p361 = scmp.ne.s32.totalorder %s353, %s356
    %p362 = scmp.eq.s32.totalorder %s23, 0
    %p363 = por %p361, %p362
    %p364 = scmp.ne.s32.totalorder %s353, %s356
    %p365 = scmp.eq.s32.totalorder %s28, 1
    %p366 = por %p364, %p365
    %p367 = scmp.ne.s32.totalorder %s356, %s357
    %p368 = scmp.eq.s32.totalorder %s28, 0
    %p369 = por %p367, %p368
    %p370 = scmp.ne.s32.totalorder %s356, %s357
    %p371 = scmp.eq.s32.totalorder %s29, 1
    %p372 = por %p370, %p371
    %p374 = scmp.ne.s32.totalorder %s357, %s373
    %p375 = scmp.eq.s32.totalorder %s29, 0
    %p376 = por %p374, %p375
    %s377 = ssub.s32 %s23, %s30
    %p378 = scmp.eq.s32.totalorder %s377, 0
    %s380 = sadd.s32 %s379, 1
    %s381 = scalar_select %p378, %s379, %s380
    %p384 = pneg %p378
    %p385 = scmp.eq.s32.totalorder %s23, 1
    %p386 = por %p384, %p385
    %p387 = scmp.ne.s32.totalorder %s379, %s382
    %p388 = scmp.eq.s32.totalorder %s23, 0
    %p389 = por %p387, %p388
    %p390 = scmp.ne.s32.totalorder %s379, %s382
    %p391 = scmp.eq.s32.totalorder %s28, 1
    %p392 = por %p390, %p391
    %p393 = scmp.ne.s32.totalorder %s382, %s383
    %p394 = scmp.eq.s32.totalorder %s28, 0
    %p395 = por %p393, %p394
    %p396 = scmp.ne.s32.totalorder %s382, %s383
    %p397 = scmp.eq.s32.totalorder %s29, 1
    %p398 = por %p396, %p397
    %p400 = scmp.ne.s32.totalorder %s383, %s399
    %p401 = scmp.eq.s32.totalorder %s29, 0
    %p402 = por %p400, %p401
    %p403 = scmp.le.s32.totalorder 1, %s23
    %p404 = scmp.lt.s32.totalorder %s23, 3
    %p405 = pnand %p403, %p404
    %p406 = pneg %p405
    // Predicated region
    $region9: #{dfr_forward.1} parent=5 // pred_check
      _
    $region10: #{dfr_forward.1} parent=5 // pred_check_branch
      %408 = sbr.rel (%p405) target = $region12
    $region11: #{dfr_forward.1} parent=5 // pred_region
      %s409 = ssub.s32 %s23, 1
      // Predicated region
      $region13: #{dfr_forward.1} parent=11 // pred_check
        %p410 = pneg %p70
      $region14: #{dfr_forward.1} parent=11 // pred_check_branch
        %412 = sbr.rel (%p410) target = $region16
      $region15: #{dfr_forward.1} parent=11 // pred_region
        _
      $region16: #{dfr_forward.1} parent=11 // pred_fallthru
        _
      // Predicated region
      $region17: #{dfr_forward.1} parent=11 // pred_check
        %p413 = pneg %p91
      $region18: #{dfr_forward.1} parent=11 // pred_check_branch
        %415 = sbr.rel (%p413) target = $region20
      $region19: #{dfr_forward.1} parent=11 // pred_region
        _
      $region20: #{dfr_forward.1} parent=11 // pred_fallthru
        _
      // Predicated region
      $region21: #{dfr_forward.1} parent=11 // pred_check
        %p416 = pneg %p112
      $region22: #{dfr_forward.1} parent=11 // pred_check_branch
        %418 = sbr.rel (%p416) target = $region24
      $region23: #{dfr_forward.1} parent=11 // pred_region
        _
      $region24: #{dfr_forward.1} parent=11 // pred_fallthru
        _
      // Predicated region
      $region25: #{dfr_forward.1} parent=11 // pred_check
        %p419 = pneg %p133
      $region26: #{dfr_forward.1} parent=11 // pred_check_branch
        %421 = sbr.rel (%p419) target = $region28
      $region27: #{dfr_forward.1} parent=11 // pred_region
        _
      $region28: #{dfr_forward.1} parent=11 // pred_fallthru
        _
      // Predicated region
      $region29: #{dfr_forward.1} parent=11 // pred_check
        %p422 = pneg %p154
      $region30: #{dfr_forward.1} parent=11 // pred_check_branch
        %424 = sbr.rel (%p422) target = $region32
      $region31: #{dfr_forward.1} parent=11 // pred_region
        _
      $region32: #{dfr_forward.1} parent=11 // pred_fallthru
        _
      // Predicated region
      $region33: #{dfr_forward.1} parent=11 // pred_check
        %p425 = pneg %p175
      $region34: #{dfr_forward.1} parent=11 // pred_check_branch
        %427 = sbr.rel (%p425) target = $region36
      $region35: #{dfr_forward.1} parent=11 // pred_region
        _
      $region36: #{dfr_forward.1} parent=11 // pred_fallthru
        _
      // Predicated region
      $region37: #{dfr_forward.1} parent=11 // pred_check
        %p428 = pneg %p196
      $region38: #{dfr_forward.1} parent=11 // pred_check_branch
        %430 = sbr.rel (%p428) target = $region40
      $region39: #{dfr_forward.1} parent=11 // pred_region
        _
      $region40: #{dfr_forward.1} parent=11 // pred_fallthru
        _
      // Predicated region
      $region41: #{dfr_forward.1} parent=11 // pred_check
        %p431 = pneg %p217
      $region42: #{dfr_forward.1} parent=11 // pred_check_branch
        %433 = sbr.rel (%p431) target = $region44
      $region43: #{dfr_forward.1} parent=11 // pred_region
        _
      $region44: #{dfr_forward.1} parent=11 // pred_fallthru
        _
      // Predicated region
      $region45: #{dfr_forward.1} parent=11 // pred_check
        %p434 = pneg %p238
      $region46: #{dfr_forward.1} parent=11 // pred_check_branch
        %436 = sbr.rel (%p434) target = $region48
      $region47: #{dfr_forward.1} parent=11 // pred_region
        _
      $region48: #{dfr_forward.1} parent=11 // pred_fallthru
        _
      // Predicated region
      $region49: #{dfr_forward.1} parent=11 // pred_check
        %p437 = pneg %p259
      $region50: #{dfr_forward.1} parent=11 // pred_check_branch
        %439 = sbr.rel (%p437) target = $region52
      $region51: #{dfr_forward.1} parent=11 // pred_region
        _
      $region52: #{dfr_forward.1} parent=11 // pred_fallthru
        _
      // Predicated region
      $region53: #{dfr_forward.1} parent=11 // pred_check
        %p440 = pneg %p280
      $region54: #{dfr_forward.1} parent=11 // pred_check_branch
        %442 = sbr.rel (%p440) target = $region56
      $region55: #{dfr_forward.1} parent=11 // pred_region
        _
      $region56: #{dfr_forward.1} parent=11 // pred_fallthru
        _
      // Predicated region
      $region57: #{dfr_forward.1} parent=11 // pred_check
        %p443 = pneg %p301
      $region58: #{dfr_forward.1} parent=11 // pred_check_branch
        %445 = sbr.rel (%p443) target = $region60
      $region59: #{dfr_forward.1} parent=11 // pred_region
        _
      $region60: #{dfr_forward.1} parent=11 // pred_fallthru
        _
      // Predicated region
      $region61: #{dfr_forward.1} parent=11 // pred_check
        %p446 = pneg %p322
      $region62: #{dfr_forward.1} parent=11 // pred_check_branch
        %448 = sbr.rel (%p446) target = $region64
      $region63: #{dfr_forward.1} parent=11 // pred_region
        _
      $region64: #{dfr_forward.1} parent=11 // pred_fallthru
        _
      // Predicated region
      $region65: #{dfr_forward.1} parent=11 // pred_check
        %p449 = pneg %p343
      $region66: #{dfr_forward.1} parent=11 // pred_check_branch
        %451 = sbr.rel (%p449) target = $region68
      $region67: #{dfr_forward.1} parent=11 // pred_region
        _
      $region68: #{dfr_forward.1} parent=11 // pred_fallthru
        _
    $region12: #{dfr_forward.1} parent=5 // pred_fallthru
      _
    %p452 = scmp.lt.s32.totalorder %s23, 2
    // Predicated region
    $region69: #{dfr_forward.1} parent=5 // pred_check
      %p453 = pneg %p452
    $region70: #{dfr_forward.1} parent=5 // pred_check_branch
      %455 = sbr.rel (%p453) target = $region72
    $region71: #{dfr_forward.1} parent=5 // pred_region
      // Predicated region
      $region73: #{dfr_forward.1} parent=71 // pred_check
        %p456 = pneg %p43
      $region74: #{dfr_forward.1} parent=71 // pred_check_branch
        %458 = sbr.rel (%p456) target = $region76
      $region75: #{dfr_forward.1} parent=71 // pred_region
        %s459 = smul.u32 64, %s23
        %p460 = scmp.lt.s32.totalorder %s459, 127
        %s461 = scalar_select %p460, %s459, 127
        %s462 = smul.addr %s461, 4
        %s463 = scalar_lea.vmem %s0, %s462
        %s464 = smul.u32 64, %s23
      $region76: #{dfr_forward.1} parent=71 // pred_fallthru
        _
    $region72: #{dfr_forward.1} parent=5 // pred_fallthru
      _
    %p465 = scmp.le.s32.totalorder 1, %s23
    %p466 = scmp.lt.s32.totalorder %s23, 3
    %p467 = pnand %p465, %p466
    %p468 = pneg %p467
    // Predicated region
    $region77: #{dfr_forward.1} parent=5 // pred_check
      _
    $region78: #{dfr_forward.1} parent=5 // pred_check_branch
      %470 = sbr.rel (%p467) target = $region80
    $region79: #{dfr_forward.1} parent=5 // pred_region
      %s471 = ssub.s32 %s23, 1
      %s472 = smul.u32 64, %s28
      %p473 = scmp.lt.s32.totalorder %s472, 127
      %s474 = scalar_select %p473, %s472, 127
      %s475 = smul.addr %s474, 4
      %s476 = scalar_lea.vmem %s0, %s475
      %p477 = pneg %p49
      %p478 = pneg %p46
      %p479 = pneg %p70
      %p480 = pneg %p67
      %p481 = pneg %p91
      %p482 = pneg %p88
      %p483 = pneg %p112
      %p484 = pneg %p109
      %p485 = pneg %p133
      %p486 = pneg %p130
      %p487 = pneg %p154
      %p488 = pneg %p151
      %p489 = pneg %p175
      %p490 = pneg %p172
      %p491 = pneg %p196
      %p492 = pneg %p193
      %p493 = pneg %p217
      %p494 = pneg %p214
      %p495 = pneg %p238
      %p496 = pneg %p235
      %p497 = pneg %p259
      %p498 = pneg %p256
      %p499 = pneg %p280
      %p500 = pneg %p277
      %p501 = pneg %p301
      %p502 = pneg %p298
      %p503 = pneg %p322
      %p504 = pneg %p319
      %p505 = pneg %p343
      %p506 = pneg %p340
      %p507 = pneg %p369
      %p508 = pneg %p366
      %s509 = smul.u32 4, %s28
      %p510 = scmp.lt.s32.totalorder %s509, 7
      %s511 = scalar_select %p510, %s509, 7
      %s512 = smul.addr %s511, 8
      %s513 = scalar_lea.vmem %s15, %s512
      %p514 = pneg %p395
      %p515 = pneg %p392
      %s516 = smul.u32 4, %s28
      %p517 = scmp.lt.s32.totalorder %s516, 7
      %s518 = scalar_select %p517, %s516, 7
      %s519 = smul.addr %s518, 8
      %s520 = scalar_lea.vmem %s16, %s519
      %s521 = smul.u32 64, %s28
      %p522 = scmp.lt.s32.totalorder %s521, 127
      %s523 = scalar_select %p522, %s521, 127
      %s524 = smul.addr %s523, 4
      %s525 = scalar_lea.vmem %s0, %s524
      %s526 = smul.u32 64, %s28
      %s527 = smul.u32 4, %s28
      %p528 = scmp.lt.s32.totalorder %s527, 7
      %s529 = scalar_select %p528, %s527, 7
      %s530 = smul.addr %s529, 8
      %s531 = scalar_lea.vmem %s15, %s530
      %s532 = smul.u32 4, %s28
      %s533 = smul.u32 4, %s28
      %p534 = scmp.lt.s32.totalorder %s533, 7
      %s535 = scalar_select %p534, %s533, 7
      %s536 = smul.addr %s535, 8
      %s537 = scalar_lea.vmem %s16, %s536
      %s538 = smul.u32 4, %s28
      %v540 = vld [vmem:[%s525] sm:$0xf]
      %v541 = vld [vmem:[%s525 + $0x4] sm:$0xf]
      %v542 = vld [vmem:[%s525 + $0x8] sm:$0xf]
      %v543 = vld [vmem:[%s525 + $0xc] sm:$0xf]
      %v544 = vld [vmem:[%s525 + $0x10] sm:$0xf]
      %v545 = vld [vmem:[%s525 + $0x14] sm:$0xf]
      %v546 = vld [vmem:[%s525 + $0x18] sm:$0xf]
      %v547 = vld [vmem:[%s525 + $0x1c] sm:$0xf]
      %v548 = vld [vmem:[%s525 + $0x20] sm:$0xf]
      %v549 = vld [vmem:[%s525 + $0x24] sm:$0xf]
      %v550 = vld [vmem:[%s525 + $0x28] sm:$0xf]
      %v551 = vld [vmem:[%s525 + $0x2c] sm:$0xf]
      %v552 = vld [vmem:[%s525 + $0x30] sm:$0xf]
      %v553 = vld [vmem:[%s525 + $0x34] sm:$0xf]
      %v554 = vld [vmem:[%s525 + $0x38] sm:$0xf]
      %v555 = vld [vmem:[%s525 + $0x3c] sm:$0xf]
      %v556 = vld [vmem:[%s525 + $0x40] sm:$0xf]
      %v557 = vld [vmem:[%s525 + $0x44] sm:$0xf]
      %v558 = vld [vmem:[%s525 + $0x48] sm:$0xf]
      %v559 = vld [vmem:[%s525 + $0x4c] sm:$0xf]
      %v560 = vld [vmem:[%s525 + $0x50] sm:$0xf]
      %v561 = vld [vmem:[%s525 + $0x54] sm:$0xf]
      %v562 = vld [vmem:[%s525 + $0x58] sm:$0xf]
      %v563 = vld [vmem:[%s525 + $0x5c] sm:$0xf]
      %v564 = vld [vmem:[%s525 + $0x60] sm:$0xf]
      %v565 = vld [vmem:[%s525 + $0x64] sm:$0xf]
      %v566 = vld [vmem:[%s525 + $0x68] sm:$0xf]
      %v567 = vld [vmem:[%s525 + $0x6c] sm:$0xf]
      %v568 = vld [vmem:[%s525 + $0x70] sm:$0xf]
      %v569 = vld [vmem:[%s525 + $0x74] sm:$0xf]
      %v570 = vld [vmem:[%s525 + $0x78] sm:$0xf]
      %v571 = vld [vmem:[%s525 + $0x7c] sm:$0xf]
      %v572 = vld [vmem:[%s525 + $0x80] sm:$0xf]
      %v573 = vld [vmem:[%s525 + $0x84] sm:$0xf]
      %v574 = vld [vmem:[%s525 + $0x88] sm:$0xf]
      %v575 = vld [vmem:[%s525 + $0x8c] sm:$0xf]
      %v576 = vld [vmem:[%s525 + $0x90] sm:$0xf]
      %v577 = vld [vmem:[%s525 + $0x94] sm:$0xf]
      %v578 = vld [vmem:[%s525 + $0x98] sm:$0xf]
      %v579 = vld [vmem:[%s525 + $0x9c] sm:$0xf]
      %v580 = vld [vmem:[%s525 + $0xa0] sm:$0xf]
      %v581 = vld [vmem:[%s525 + $0xa4] sm:$0xf]
      %v582 = vld [vmem:[%s525 + $0xa8] sm:$0xf]
      %v583 = vld [vmem:[%s525 + $0xac] sm:$0xf]
      %v584 = vld [vmem:[%s525 + $0xb0] sm:$0xf]
      %v585 = vld [vmem:[%s525 + $0xb4] sm:$0xf]
      %v586 = vld [vmem:[%s525 + $0xb8] sm:$0xf]
      %v587 = vld [vmem:[%s525 + $0xbc] sm:$0xf]
      %v588 = vld [vmem:[%s525 + $0xc0] sm:$0xf]
      %v589 = vld [vmem:[%s525 + $0xc4] sm:$0xf]
      %v590 = vld [vmem:[%s525 + $0xc8] sm:$0xf]
      %v591 = vld [vmem:[%s525 + $0xcc] sm:$0xf]
      %v592 = vld [vmem:[%s525 + $0xd0] sm:$0xf]
      %v593 = vld [vmem:[%s525 + $0xd4] sm:$0xf]
      %v594 = vld [vmem:[%s525 + $0xd8] sm:$0xf]
      %v595 = vld [vmem:[%s525 + $0xdc] sm:$0xf]
      %v596 = vld [vmem:[%s525 + $0xe0] sm:$0xf]
      %v597 = vld [vmem:[%s525 + $0xe4] sm:$0xf]
      %v598 = vld [vmem:[%s525 + $0xe8] sm:$0xf]
      %v599 = vld [vmem:[%s525 + $0xec] sm:$0xf]
      %v600 = vld [vmem:[%s525 + $0xf0] sm:$0xf]
      %v601 = vld [vmem:[%s525 + $0xf4] sm:$0xf]
      %v602 = vld [vmem:[%s525 + $0xf8] sm:$0xf]
      %v603 = vld [vmem:[%s525 + $0xfc] sm:$0xf]
      %v604 = vld [vmem:[%s1] sm:$0xf]
      %v605 = vld [vmem:[%s1 + $0x4] sm:$0xf]
      %v606 = vld [vmem:[%s1 + $0x8] sm:$0xf]
      %v607 = vld [vmem:[%s1 + $0xc] sm:$0xf]
      %v608 = vld [vmem:[%s1 + $0x10] sm:$0xf]
      %v609 = vld [vmem:[%s1 + $0x14] sm:$0xf]
      %v610 = vld [vmem:[%s1 + $0x18] sm:$0xf]
      %v611 = vld [vmem:[%s1 + $0x1c] sm:$0xf]
      %v612 = vld [vmem:[%s2] sm:$0x1]
      %v614 = vlaneseq
      %v615 = vshrl.u32 %v614, 7
      %v616 = vsub.s32 0, %v615
      %v617 = vrot.slane %v612, %v616
      %v683 = vunpack.c.l.b16 %v540
      %v684 = vunpack.c.l.b16 %v541
      %v685 = vunpack.c.l.b16 %v542
      %v686 = vunpack.c.l.b16 %v543
      %v687 = vunpack.c.l.b16 %v544
      %v688 = vunpack.c.l.b16 %v545
      %v689 = vunpack.c.l.b16 %v546
      %v690 = vunpack.c.l.b16 %v547
      %v691 = vunpack.c.l.b16 %v548
      %v692 = vunpack.c.l.b16 %v549
      %v693 = vunpack.c.l.b16 %v550
      %v694 = vunpack.c.l.b16 %v551
      %v695 = vunpack.c.l.b16 %v552
      %v696 = vunpack.c.l.b16 %v553
      %v697 = vunpack.c.l.b16 %v554
      %v698 = vunpack.c.l.b16 %v555
      %v699 = vunpack.c.l.b16 %v556
      %v700 = vunpack.c.l.b16 %v557
      %v701 = vunpack.c.l.b16 %v558
      %v702 = vunpack.c.l.b16 %v559
      %v703 = vunpack.c.l.b16 %v560
      %v704 = vunpack.c.l.b16 %v561
      %v705 = vunpack.c.l.b16 %v562
      %v706 = vunpack.c.l.b16 %v563
      %v707 = vunpack.c.l.b16 %v564
      %v708 = vunpack.c.l.b16 %v565
      %v709 = vunpack.c.l.b16 %v566
      %v710 = vunpack.c.l.b16 %v567
      %v711 = vunpack.c.l.b16 %v568
      %v712 = vunpack.c.l.b16 %v569
      %v713 = vunpack.c.l.b16 %v570
      %v714 = vunpack.c.l.b16 %v571
      %v715 = vunpack.c.l.b16 %v572
      %v716 = vunpack.c.l.b16 %v573
      %v717 = vunpack.c.l.b16 %v574
      %v718 = vunpack.c.l.b16 %v575
      %v719 = vunpack.c.l.b16 %v576
      %v720 = vunpack.c.l.b16 %v577
      %v721 = vunpack.c.l.b16 %v578
      %v722 = vunpack.c.l.b16 %v579
      %v723 = vunpack.c.l.b16 %v580
      %v724 = vunpack.c.l.b16 %v581
      %v725 = vunpack.c.l.b16 %v582
      %v726 = vunpack.c.l.b16 %v583
      %v727 = vunpack.c.l.b16 %v584
      %v728 = vunpack.c.l.b16 %v585
      %v729 = vunpack.c.l.b16 %v586
      %v730 = vunpack.c.l.b16 %v587
      %v731 = vunpack.c.l.b16 %v588
      %v732 = vunpack.c.l.b16 %v589
      %v733 = vunpack.c.l.b16 %v590
      %v734 = vunpack.c.l.b16 %v591
      %v735 = vunpack.c.l.b16 %v592
      %v736 = vunpack.c.l.b16 %v593
      %v737 = vunpack.c.l.b16 %v594
      %v738 = vunpack.c.l.b16 %v595
      %v739 = vunpack.c.l.b16 %v596
      %v740 = vunpack.c.l.b16 %v597
      %v741 = vunpack.c.l.b16 %v598
      %v742 = vunpack.c.l.b16 %v599
      %v743 = vunpack.c.l.b16 %v600
      %v744 = vunpack.c.l.b16 %v601
      %v745 = vunpack.c.l.b16 %v602
      %v746 = vunpack.c.l.b16 %v603
      %v747 = vpack.c.b16 %v684, %v683
      %v748 = vpack.c.b16 %v686, %v685
      %v749 = vpack.c.b16 %v688, %v687
      %v750 = vpack.c.b16 %v690, %v689
      %v751 = vpack.c.b16 %v692, %v691
      %v752 = vpack.c.b16 %v694, %v693
      %v753 = vpack.c.b16 %v696, %v695
      %v754 = vpack.c.b16 %v698, %v697
      %v755 = vpack.c.b16 %v700, %v699
      %v756 = vpack.c.b16 %v702, %v701
      %v757 = vpack.c.b16 %v704, %v703
      %v758 = vpack.c.b16 %v706, %v705
      %v759 = vpack.c.b16 %v708, %v707
      %v760 = vpack.c.b16 %v710, %v709
      %v761 = vpack.c.b16 %v712, %v711
      %v762 = vpack.c.b16 %v714, %v713
      %v763 = vpack.c.b16 %v716, %v715
      %v764 = vpack.c.b16 %v718, %v717
      %v765 = vpack.c.b16 %v720, %v719
      %v766 = vpack.c.b16 %v722, %v721
      %v767 = vpack.c.b16 %v724, %v723
      %v768 = vpack.c.b16 %v726, %v725
      %v769 = vpack.c.b16 %v728, %v727
      %v770 = vpack.c.b16 %v730, %v729
      %v771 = vpack.c.b16 %v732, %v731
      %v772 = vpack.c.b16 %v734, %v733
      %v773 = vpack.c.b16 %v736, %v735
      %v774 = vpack.c.b16 %v738, %v737
      %v775 = vpack.c.b16 %v740, %v739
      %v776 = vpack.c.b16 %v742, %v741
      %v777 = vpack.c.b16 %v744, %v743
      %v778 = vpack.c.b16 %v746, %v745
      %v787 = vunpack.c.l.b16 %v604
      %v788 = vunpack.c.l.b16 %v605
      %v789 = vunpack.c.l.b16 %v606
      %v790 = vunpack.c.l.b16 %v607
      %v791 = vunpack.c.l.b16 %v608
      %v792 = vunpack.c.l.b16 %v609
      %v793 = vunpack.c.l.b16 %v610
      %v794 = vunpack.c.l.b16 %v611
      %v795 = vpack.c.b16 %v788, %v787
      %v796 = vpack.c.b16 %v790, %v789
      %v797 = vpack.c.b16 %v792, %v791
      %v798 = vpack.c.b16 %v794, %v793
      %vm803 = vcmask 523264
      %v805 = vsel %vm803, %v747, 0
      %v808 = vsel %vm803, %v748, 0
      %v811 = vsel %vm803, %v749, 0
      %v814 = vsel %vm803, %v750, 0
      %v817 = vsel %vm803, %v751, 0
      %v820 = vsel %vm803, %v752, 0
      %v823 = vsel %vm803, %v753, 0
      %v826 = vsel %vm803, %v754, 0
      %v829 = vsel %vm803, %v755, 0
      %v832 = vsel %vm803, %v756, 0
      %v835 = vsel %vm803, %v757, 0
      %v838 = vsel %vm803, %v758, 0
      %v841 = vsel %vm803, %v759, 0
      %v844 = vsel %vm803, %v760, 0
      %v847 = vsel %vm803, %v761, 0
      %v850 = vsel %vm803, %v762, 0
      %v853 = vsel %vm803, %v763, 0
      %v856 = vsel %vm803, %v764, 0
      %v859 = vsel %vm803, %v765, 0
      %v862 = vsel %vm803, %v766, 0
      %v865 = vsel %vm803, %v767, 0
      %v868 = vsel %vm803, %v768, 0
      %v871 = vsel %vm803, %v769, 0
      %v874 = vsel %vm803, %v770, 0
      %v877 = vsel %vm803, %v771, 0
      %v880 = vsel %vm803, %v772, 0
      %v883 = vsel %vm803, %v773, 0
      %v886 = vsel %vm803, %v774, 0
      %v889 = vsel %vm803, %v775, 0
      %v892 = vsel %vm803, %v776, 0
      %v895 = vsel %vm803, %v777, 0
      %v898 = vsel %vm803, %v778, 0
      %900 = vmatprep.subr.bf16.mxu0 0
      %901 = vmatpush1.bf16.msra.mxu0 %v795
      %902 = vmatprep.subr.bf16.mxu0 0
      %903 = vmatpush1.bf16.msra.mxu0 %v796
      %904 = vmatprep.subr.bf16.mxu0 0
      %905 = vmatpush1.bf16.msra.mxu0 %v797
      %906 = vmatprep.subr.bf16.mxu0 0
      %907 = vmatpush1.bf16.msra.mxu0 %v798
      %908 = vmatprep.subr.bf16.mxu0 0
      %909 = vmatpush1.bf16.msra.mxu0 0
      %910 = vmatprep.subr.bf16.mxu0 0
      %911 = vmatpush1.bf16.msra.mxu0 0
      %912 = vmatprep.subr.bf16.mxu0 0
      %913 = vmatpush1.bf16.msra.mxu0 0
      %914 = vmatprep.subr.bf16.mxu0 0
      %915 = vmatpush1.bf16.msra.mxu0 0
      %916 = vmatprep.subr.bf16.mxu0 0
      %917 = vmatpush1.bf16.msra.mxu0 0
      %918 = vmatprep.subr.bf16.mxu0 0
      %919 = vmatpush1.bf16.msra.mxu0 0
      %920 = vmatprep.subr.bf16.mxu0 0
      %921 = vmatpush1.bf16.msra.mxu0 0
      %922 = vmatprep.subr.bf16.mxu0 0
      %923 = vmatpush1.bf16.msra.mxu0 0
      %924 = vmatprep.subr.bf16.mxu0 0
      %925 = vmatpush1.bf16.msra.mxu0 0
      %926 = vmatprep.subr.bf16.mxu0 0
      %927 = vmatpush1.bf16.msra.mxu0 0
      %928 = vmatprep.subr.bf16.mxu0 0
      %929 = vmatpush1.bf16.msra.mxu0 0
      %930 = vmatprep.subr.bf16.mxu0 0
      %931 = vmatpush1.bf16.msra.mxu0 0
      %932 = vmatprep.mubr.bf16.mxu0 0
      %933 = vmatmul.mubr.bf16.gmra.mrb[0].mxu0 %v805
      %v934 = vpop.f32.mrb[0].mxu0
      %v935 = vadd.f32 %v617, %v934
      %v936 = vpop.f32.mrb[0].mxu0
      %v937 = vpop.f32.mrb[0].mxu0
      %v938 = vadd.f32 %v617, %v937
      %v939 = vpop.f32.mrb[0].mxu0
      %940 = vmatprep.mubr.bf16.mxu0 0
      %941 = vmatmul.mubr.bf16.gmra.mrb[0].mxu0 %v808
      %v942 = vpop.f32.mrb[0].mxu0
      %v943 = vadd.f32 %v617, %v942
      %v944 = vpop.f32.mrb[0].mxu0
      %v945 = vpop.f32.mrb[0].mxu0
      %v946 = vadd.f32 %v617, %v945
      %v947 = vpop.f32.mrb[0].mxu0
      %948 = vmatprep.mubr.bf16.mxu0 0
      %949 = vmatmul.mubr.bf16.gmra.mrb[0].mxu0 %v811
      %v950 = vpop.f32.mrb[0].mxu0
      %v951 = vadd.f32 %v617, %v950
      %v952 = vpop.f32.mrb[0].mxu0
      %v953 = vpop.f32.mrb[0].mxu0
      %v954 = vadd.f32 %v617, %v953
      %v955 = vpop.f32.mrb[0].mxu0
      %956 = vmatprep.mubr.bf16.mxu0 0
      %957 = vmatmul.mubr.bf16.gmra.mrb[0].mxu0 %v814
      %v958 = vpop.f32.mrb[0].mxu0
      %v959 = vadd.f32 %v617, %v958
      %v960 = vpop.f32.mrb[0].mxu0
      %v961 = vpop.f32.mrb[0].mxu0
      %v962 = vadd.f32 %v617, %v961
      %v963 = vpop.f32.mrb[0].mxu0
      %964 = vmatprep.mubr.bf16.mxu0 0
      %965 = vmatmul.mubr.bf16.gmra.mrb[0].mxu0 %v817
      %v966 = vpop.f32.mrb[0].mxu0
      %v967 = vadd.f32 %v617, %v966
      %v968 = vpop.f32.mrb[0].mxu0
      %v969 = vpop.f32.mrb[0].mxu0
      %v970 = vadd.f32 %v617, %v969
      %v971 = vpop.f32.mrb[0].mxu0
      %972 = vmatprep.mubr.bf16.mxu0 0
      %973 = vmatmul.mubr.bf16.gmra.mrb[0].mxu0 %v820
      %v974 = vpop.f32.mrb[0].mxu0
      %v975 = vadd.f32 %v617, %v974
      %v976 = vpop.f32.mrb[0].mxu0
      %v977 = vpop.f32.mrb[0].mxu0
      %v978 = vadd.f32 %v617, %v977
      %v979 = vpop.f32.mrb[0].mxu0
      %980 = vmatprep.mubr.bf16.mxu0 0
      %981 = vmatmul.mubr.bf16.gmra.mrb[0].mxu0 %v823
      %v982 = vpop.f32.mrb[0].mxu0
      %v983 = vadd.f32 %v617, %v982
      %v984 = vpop.f32.mrb[0].mxu0
      %v985 = vpop.f32.mrb[0].mxu0
      %v986 = vadd.f32 %v617, %v985
      %v987 = vpop.f32.mrb[0].mxu0
      %988 = vmatprep.mubr.bf16.mxu0 0
      %989 = vmatmul.mubr.bf16.gmra.mrb[0].mxu0 %v826
      %v990 = vpop.f32.mrb[0].mxu0
      %v991 = vadd.f32 %v617, %v990
      %v992 = vpop.f32.mrb[0].mxu0
      %v993 = vpop.f32.mrb[0].mxu0
      %v994 = vadd.f32 %v617, %v993
      %v995 = vpop.f32.mrb[0].mxu0
      %996 = vmatprep.mubr.bf16.mxu0 0
      %997 = vmatmul.mubr.bf16.gmra.mrb[0].mxu0 %v829
      %v998 = vpop.f32.mrb[0].mxu0
      %v999 = vadd.f32 %v617, %v998
      %v1000 = vpop.f32.mrb[0].mxu0
      %v1001 = vpop.f32.mrb[0].mxu0
      %v1002 = vadd.f32 %v617, %v1001
      %v1003 = vpop.f32.mrb[0].mxu0
      %1004 = vmatprep.mubr.bf16.mxu0 0
      %1005 = vmatmul.mubr.bf16.gmra.mrb[0].mxu0 %v832
      %v1006 = vpop.f32.mrb[0].mxu0
      %v1007 = vadd.f32 %v617, %v1006
      %v1008 = vpop.f32.mrb[0].mxu0
      %v1009 = vpop.f32.mrb[0].mxu0
      %v1010 = vadd.f32 %v617, %v1009
      %v1011 = vpop.f32.mrb[0].mxu0
      %1012 = vmatprep.mubr.bf16.mxu0 0
      %1013 = vmatmul.mubr.bf16.gmra.mrb[0].mxu0 %v835
      %v1014 = vpop.f32.mrb[0].mxu0
      %v1015 = vadd.f32 %v617, %v1014
      %v1016 = vpop.f32.mrb[0].mxu0
      %v1017 = vpop.f32.mrb[0].mxu0
      %v1018 = vadd.f32 %v617, %v1017
      %v1019 = vpop.f32.mrb[0].mxu0
      %1020 = vmatprep.mubr.bf16.mxu0 0
      %1021 = vmatmul.mubr.bf16.gmra.mrb[0].mxu0 %v838
      %v1022 = vpop.f32.mrb[0].mxu0
      %v1023 = vadd.f32 %v617, %v1022
      %v1024 = vpop.f32.mrb[0].mxu0
      %v1025 = vpop.f32.mrb[0].mxu0
      %v1026 = vadd.f32 %v617, %v1025
      %v1027 = vpop.f32.mrb[0].mxu0
      %1028 = vmatprep.mubr.bf16.mxu0 0
      %1029 = vmatmul.mubr.bf16.gmra.mrb[0].mxu0 %v841
      %v1030 = vpop.f32.mrb[0].mxu0
      %v1031 = vadd.f32 %v617, %v1030
      %v1032 = vpop.f32.mrb[0].mxu0
      %v1033 = vpop.f32.mrb[0].mxu0
      %v1034 = vadd.f32 %v617, %v1033
      %v1035 = vpop.f32.mrb[0].mxu0
      %1036 = vmatprep.mubr.bf16.mxu0 0
      %1037 = vmatmul.mubr.bf16.gmra.mrb[0].mxu0 %v844
      %v1038 = vpop.f32.mrb[0].mxu0
      %v1039 = vadd.f32 %v617, %v1038
      %v1040 = vpop.f32.mrb[0].mxu0
      %v1041 = vpop.f32.mrb[0].mxu0
      %v1042 = vadd.f32 %v617, %v1041
      %v1043 = vpop.f32.mrb[0].mxu0
      %1044 = vmatprep.mubr.bf16.mxu0 0
      %1045 = vmatmul.mubr.bf16.gmra.mrb[0].mxu0 %v847
      %v1046 = vpop.f32.mrb[0].mxu0
      %v1047 = vadd.f32 %v617, %v1046
      %v1048 = vpop.f32.mrb[0].mxu0
      %v1049 = vpop.f32.mrb[0].mxu0
      %v1050 = vadd.f32 %v617, %v1049
      %v1051 = vpop.f32.mrb[0].mxu0
      %1052 = vmatprep.mubr.bf16.mxu0 0
      %1053 = vmatmul.mubr.bf16.gmra.mrb[0].mxu0 %v850
      %v1054 = vpop.f32.mrb[0].mxu0
      %v1055 = vadd.f32 %v617, %v1054
      %v1056 = vpop.f32.mrb[0].mxu0
      %v1057 = vpop.f32.mrb[0].mxu0
      %v1058 = vadd.f32 %v617, %v1057
      %v1059 = vpop.f32.mrb[0].mxu0
      %1060 = vmatprep.mubr.bf16.mxu0 0
      %1061 = vmatmul.mubr.bf16.gmra.mrb[0].mxu0 %v853
      %v1062 = vpop.f32.mrb[0].mxu0
      %v1063 = vadd.f32 %v617, %v1062
      %v1064 = vpop.f32.mrb[0].mxu0
      %v1065 = vpop.f32.mrb[0].mxu0
      %v1066 = vadd.f32 %v617, %v1065
      %v1067 = vpop.f32.mrb[0].mxu0
      %1068 = vmatprep.mubr.bf16.mxu0 0
      %1069 = vmatmul.mubr.bf16.gmra.mrb[0].mxu0 %v856
      %v1070 = vpop.f32.mrb[0].mxu0
      %v1071 = vadd.f32 %v617, %v1070
      %v1072 = vpop.f32.mrb[0].mxu0
      %v1073 = vpop.f32.mrb[0].mxu0
      %v1074 = vadd.f32 %v617, %v1073
      %v1075 = vpop.f32.mrb[0].mxu0
      %1076 = vmatprep.mubr.bf16.mxu0 0
      %1077 = vmatmul.mubr.bf16.gmra.mrb[0].mxu0 %v859
      %v1078 = vpop.f32.mrb[0].mxu0
      %v1079 = vadd.f32 %v617, %v1078
      %v1080 = vpop.f32.mrb[0].mxu0
      %v1081 = vpop.f32.mrb[0].mxu0
      %v1082 = vadd.f32 %v617, %v1081
      %v1083 = vpop.f32.mrb[0].mxu0
      %1084 = vmatprep.mubr.bf16.mxu0 0
      %1085 = vmatmul.mubr.bf16.gmra.mrb[0].mxu0 %v862
      %v1086 = vpop.f32.mrb[0].mxu0
      %v1087 = vadd.f32 %v617, %v1086
      %v1088 = vpop.f32.mrb[0].mxu0
      %v1089 = vpop.f32.mrb[0].mxu0
      %v1090 = vadd.f32 %v617, %v1089
      %v1091 = vpop.f32.mrb[0].mxu0
      %1092 = vmatprep.mubr.bf16.mxu0 0
      %1093 = vmatmul.mubr.bf16.gmra.mrb[0].mxu0 %v865
      %v1094 = vpop.f32.mrb[0].mxu0
      %v1095 = vadd.f32 %v617, %v1094
      %v1096 = vpop.f32.mrb[0].mxu0
      %v1097 = vpop.f32.mrb[0].mxu0
      %v1098 = vadd.f32 %v617, %v1097
      %v1099 = vpop.f32.mrb[0].mxu0
      %1100 = vmatprep.mubr.bf16.mxu0 0
      %1101 = vmatmul.mubr.bf16.gmra.mrb[0].mxu0 %v868
      %v1102 = vpop.f32.mrb[0].mxu0
      %v1103 = vadd.f32 %v617, %v1102
      %v1104 = vpop.f32.mrb[0].mxu0
      %v1105 = vpop.f32.mrb[0].mxu0
      %v1106 = vadd.f32 %v617, %v1105
      %v1107 = vpop.f32.mrb[0].mxu0
      %1108 = vmatprep.mubr.bf16.mxu0 0
      %1109 = vmatmul.mubr.bf16.gmra.mrb[0].mxu0 %v871
      %v1110 = vpop.f32.mrb[0].mxu0
      %v1111 = vadd.f32 %v617, %v1110
      %v1112 = vpop.f32.mrb[0].mxu0
      %v1113 = vpop.f32.mrb[0].mxu0
      %v1114 = vadd.f32 %v617, %v1113
      %v1115 = vpop.f32.mrb[0].mxu0
      %1116 = vmatprep.mubr.bf16.mxu0 0
      %1117 = vmatmul.mubr.bf16.gmra.mrb[0].mxu0 %v874
      %v1118 = vpop.f32.mrb[0].mxu0
      %v1119 = vadd.f32 %v617, %v1118
      %v1120 = vpop.f32.mrb[0].mxu0
      %v1121 = vpop.f32.mrb[0].mxu0
      %v1122 = vadd.f32 %v617, %v1121
      %v1123 = vpop.f32.mrb[0].mxu0
      %1124 = vmatprep.mubr.bf16.mxu0 0
      %1125 = vmatmul.mubr.bf16.gmra.mrb[0].mxu0 %v877
      %v1126 = vpop.f32.mrb[0].mxu0
      %v1127 = vadd.f32 %v617, %v1126
      %v1128 = vpop.f32.mrb[0].mxu0
      %v1129 = vpop.f32.mrb[0].mxu0
      %v1130 = vadd.f32 %v617, %v1129
      %v1131 = vpop.f32.mrb[0].mxu0
      %1132 = vmatprep.mubr.bf16.mxu0 0
      %1133 = vmatmul.mubr.bf16.gmra.mrb[0].mxu0 %v880
      %v1134 = vpop.f32.mrb[0].mxu0
      %v1135 = vadd.f32 %v617, %v1134
      %v1136 = vpop.f32.mrb[0].mxu0
      %v1137 = vpop.f32.mrb[0].mxu0
      %v1138 = vadd.f32 %v617, %v1137
      %v1139 = vpop.f32.mrb[0].mxu0
      %1140 = vmatprep.mubr.bf16.mxu0 0
      %1141 = vmatmul.mubr.bf16.gmra.mrb[0].mxu0 %v883
      %v1142 = vpop.f32.mrb[0].mxu0
      %v1143 = vadd.f32 %v617, %v1142
      %v1144 = vpop.f32.mrb[0].mxu0
      %v1145 = vpop.f32.mrb[0].mxu0
      %v1146 = vadd.f32 %v617, %v1145
      %v1147 = vpop.f32.mrb[0].mxu0
      %1148 = vmatprep.mubr.bf16.mxu0 0
      %1149 = vmatmul.mubr.bf16.gmra.mrb[0].mxu0 %v886
      %v1150 = vpop.f32.mrb[0].mxu0
      %v1151 = vadd.f32 %v617, %v1150
      %v1152 = vpop.f32.mrb[0].mxu0
      %v1153 = vpop.f32.mrb[0].mxu0
      %v1154 = vadd.f32 %v617, %v1153
      %v1155 = vpop.f32.mrb[0].mxu0
      %1156 = vmatprep.mubr.bf16.mxu0 0
      %1157 = vmatmul.mubr.bf16.gmra.mrb[0].mxu0 %v889
      %v1158 = vpop.f32.mrb[0].mxu0
      %v1159 = vadd.f32 %v617, %v1158
      %v1160 = vpop.f32.mrb[0].mxu0
      %v1161 = vpop.f32.mrb[0].mxu0
      %v1162 = vadd.f32 %v617, %v1161
      %v1163 = vpop.f32.mrb[0].mxu0
      %1164 = vmatprep.mubr.bf16.mxu0 0
      %1165 = vmatmul.mubr.bf16.gmra.mrb[0].mxu0 %v892
      %v1166 = vpop.f32.mrb[0].mxu0
      %v1167 = vadd.f32 %v617, %v1166
      %v1168 = vpop.f32.mrb[0].mxu0
      %v1169 = vpop.f32.mrb[0].mxu0
      %v1170 = vadd.f32 %v617, %v1169
      %v1171 = vpop.f32.mrb[0].mxu0
      %1172 = vmatprep.mubr.bf16.mxu0 0
      %1173 = vmatmul.mubr.bf16.gmra.mrb[0].mxu0 %v895
      %v1174 = vpop.f32.mrb[0].mxu0
      %v1175 = vadd.f32 %v617, %v1174
      %v1176 = vpop.f32.mrb[0].mxu0
      %v1177 = vpop.f32.mrb[0].mxu0
      %v1178 = vadd.f32 %v617, %v1177
      %v1179 = vpop.f32.mrb[0].mxu0
      %1180 = vmatprep.mubr.bf16.mxu0 0
      %1181 = vmatmul.mubr.bf16.gmra.mrb[0].mxu0 %v898
      %v1182 = vpop.f32.mrb[0].mxu0
      %v1183 = vadd.f32 %v617, %v1182
      %v1184 = vpop.f32.mrb[0].mxu0
      %v1185 = vpop.f32.mrb[0].mxu0
      %v1186 = vadd.f32 %v617, %v1185
      %v1187 = vpop.f32.mrb[0].mxu0
      %1188 = vdwg.mxu0
      %v1189 = vmax.f32 %v935, 0.0
      %v1190 = vmax.f32 %v938, 0.0
      %v1191 = vmax.f32 %v943, 0.0
      %v1192 = vmax.f32 %v946, 0.0
      %v1193 = vmax.f32 %v951, 0.0
      %v1194 = vmax.f32 %v954, 0.0
      %v1195 = vmax.f32 %v959, 0.0
      %v1196 = vmax.f32 %v962, 0.0
      %v1197 = vmax.f32 %v967, 0.0
      %v1198 = vmax.f32 %v970, 0.0
      %v1199 = vmax.f32 %v975, 0.0
      %v1200 = vmax.f32 %v978, 0.0
      %v1201 = vmax.f32 %v983, 0.0
      %v1202 = vmax.f32 %v986, 0.0
      %v1203 = vmax.f32 %v991, 0.0
      %v1204 = vmax.f32 %v994, 0.0
      %v1205 = vmax.f32 %v999, 0.0
      %v1206 = vmax.f32 %v1002, 0.0
      %v1207 = vmax.f32 %v1007, 0.0
      %v1208 = vmax.f32 %v1010, 0.0
      %v1209 = vmax.f32 %v1015, 0.0
      %v1210 = vmax.f32 %v1018, 0.0
      %v1211 = vmax.f32 %v1023, 0.0
      %v1212 = vmax.f32 %v1026, 0.0
      %v1213 = vmax.f32 %v1031, 0.0
      %v1214 = vmax.f32 %v1034, 0.0
      %v1215 = vmax.f32 %v1039, 0.0
      %v1216 = vmax.f32 %v1042, 0.0
      %v1217 = vmax.f32 %v1047, 0.0
      %v1218 = vmax.f32 %v1050, 0.0
      %v1219 = vmax.f32 %v1055, 0.0
      %v1220 = vmax.f32 %v1058, 0.0
      %v1221 = vmax.f32 %v1063, 0.0
      %v1222 = vmax.f32 %v1066, 0.0
      %v1223 = vmax.f32 %v1071, 0.0
      %v1224 = vmax.f32 %v1074, 0.0
      %v1225 = vmax.f32 %v1079, 0.0
      %v1226 = vmax.f32 %v1082, 0.0
      %v1227 = vmax.f32 %v1087, 0.0
      %v1228 = vmax.f32 %v1090, 0.0
      %v1229 = vmax.f32 %v1095, 0.0
      %v1230 = vmax.f32 %v1098, 0.0
      %v1231 = vmax.f32 %v1103, 0.0
      %v1232 = vmax.f32 %v1106, 0.0
      %v1233 = vmax.f32 %v1111, 0.0
      %v1234 = vmax.f32 %v1114, 0.0
      %v1235 = vmax.f32 %v1119, 0.0
      %v1236 = vmax.f32 %v1122, 0.0
      %v1237 = vmax.f32 %v1127, 0.0
      %v1238 = vmax.f32 %v1130, 0.0
      %v1239 = vmax.f32 %v1135, 0.0
      %v1240 = vmax.f32 %v1138, 0.0
      %v1241 = vmax.f32 %v1143, 0.0
      %v1242 = vmax.f32 %v1146, 0.0
      %v1243 = vmax.f32 %v1151, 0.0
      %v1244 = vmax.f32 %v1154, 0.0
      %v1245 = vmax.f32 %v1159, 0.0
      %v1246 = vmax.f32 %v1162, 0.0
      %v1247 = vmax.f32 %v1167, 0.0
      %v1248 = vmax.f32 %v1170, 0.0
      %v1249 = vmax.f32 %v1175, 0.0
      %v1250 = vmax.f32 %v1178, 0.0
      %v1251 = vmax.f32 %v1183, 0.0
      %v1252 = vmax.f32 %v1186, 0.0
      %v1253 = vadd.f32 %v1189, %v1190
      %v1254 = vrot.slane %v1253, 4
      %v1255 = vadd.f32 %v1253, %v1254
      %v1256 = vrot.slane %v1255, 2
      %v1257 = vadd.f32 %v1255, %v1256
      %v1258 = vrot.slane %v1257, 1
      %v1259 = vadd.f32 %v1257, %v1258
      %v1260 = vadd.f32 %v1191, %v1192
      %v1261 = vrot.slane %v1260, 4
      %v1262 = vadd.f32 %v1260, %v1261
      %v1263 = vrot.slane %v1262, 2
      %v1264 = vadd.f32 %v1262, %v1263
      %v1265 = vrot.slane %v1264, 1
      %v1266 = vadd.f32 %v1264, %v1265
      %v1267 = vadd.f32 %v1193, %v1194
      %v1268 = vrot.slane %v1267, 4
      %v1269 = vadd.f32 %v1267, %v1268
      %v1270 = vrot.slane %v1269, 2
      %v1271 = vadd.f32 %v1269, %v1270
      %v1272 = vrot.slane %v1271, 1
      %v1273 = vadd.f32 %v1271, %v1272
      %v1274 = vadd.f32 %v1195, %v1196
      %v1275 = vrot.slane %v1274, 4
      %v1276 = vadd.f32 %v1274, %v1275
      %v1277 = vrot.slane %v1276, 2
      %v1278 = vadd.f32 %v1276, %v1277
      %v1279 = vrot.slane %v1278, 1
      %v1280 = vadd.f32 %v1278, %v1279
      %v1281 = vadd.f32 %v1197, %v1198
      %v1282 = vrot.slane %v1281, 4
      %v1283 = vadd.f32 %v1281, %v1282
      %v1284 = vrot.slane %v1283, 2
      %v1285 = vadd.f32 %v1283, %v1284
      %v1286 = vrot.slane %v1285, 1
      %v1287 = vadd.f32 %v1285, %v1286
      %v1288 = vadd.f32 %v1199, %v1200
      %v1289 = vrot.slane %v1288, 4
      %v1290 = vadd.f32 %v1288, %v1289
      %v1291 = vrot.slane %v1290, 2
      %v1292 = vadd.f32 %v1290, %v1291
      %v1293 = vrot.slane %v1292, 1
      %v1294 = vadd.f32 %v1292, %v1293
      %v1295 = vadd.f32 %v1201, %v1202
      %v1296 = vrot.slane %v1295, 4
      %v1297 = vadd.f32 %v1295, %v1296
      %v1298 = vrot.slane %v1297, 2
      %v1299 = vadd.f32 %v1297, %v1298
      %v1300 = vrot.slane %v1299, 1
      %v1301 = vadd.f32 %v1299, %v1300
      %v1302 = vadd.f32 %v1203, %v1204
      %v1303 = vrot.slane %v1302, 4
      %v1304 = vadd.f32 %v1302, %v1303
      %v1305 = vrot.slane %v1304, 2
      %v1306 = vadd.f32 %v1304, %v1305
      %v1307 = vrot.slane %v1306, 1
      %v1308 = vadd.f32 %v1306, %v1307
      %v1309 = vadd.f32 %v1205, %v1206
      %v1310 = vrot.slane %v1309, 4
      %v1311 = vadd.f32 %v1309, %v1310
      %v1312 = vrot.slane %v1311, 2
      %v1313 = vadd.f32 %v1311, %v1312
      %v1314 = vrot.slane %v1313, 1
      %v1315 = vadd.f32 %v1313, %v1314
      %v1316 = vadd.f32 %v1207, %v1208
      %v1317 = vrot.slane %v1316, 4
      %v1318 = vadd.f32 %v1316, %v1317
      %v1319 = vrot.slane %v1318, 2
      %v1320 = vadd.f32 %v1318, %v1319
      %v1321 = vrot.slane %v1320, 1
      %v1322 = vadd.f32 %v1320, %v1321
      %v1323 = vadd.f32 %v1209, %v1210
      %v1324 = vrot.slane %v1323, 4
      %v1325 = vadd.f32 %v1323, %v1324
      %v1326 = vrot.slane %v1325, 2
      %v1327 = vadd.f32 %v1325, %v1326
      %v1328 = vrot.slane %v1327, 1
      %v1329 = vadd.f32 %v1327, %v1328
      %v1330 = vadd.f32 %v1211, %v1212
      %v1331 = vrot.slane %v1330, 4
      %v1332 = vadd.f32 %v1330, %v1331
      %v1333 = vrot.slane %v1332, 2
      %v1334 = vadd.f32 %v1332, %v1333
      %v1335 = vrot.slane %v1334, 1
      %v1336 = vadd.f32 %v1334, %v1335
      %v1337 = vadd.f32 %v1213, %v1214
      %v1338 = vrot.slane %v1337, 4
      %v1339 = vadd.f32 %v1337, %v1338
      %v1340 = vrot.slane %v1339, 2
      %v1341 = vadd.f32 %v1339, %v1340
      %v1342 = vrot.slane %v1341, 1
      %v1343 = vadd.f32 %v1341, %v1342
      %v1344 = vadd.f32 %v1215, %v1216
      %v1345 = vrot.slane %v1344, 4
      %v1346 = vadd.f32 %v1344, %v1345
      %v1347 = vrot.slane %v1346, 2
      %v1348 = vadd.f32 %v1346, %v1347
      %v1349 = vrot.slane %v1348, 1
      %v1350 = vadd.f32 %v1348, %v1349
      %v1351 = vadd.f32 %v1217, %v1218
      %v1352 = vrot.slane %v1351, 4
      %v1353 = vadd.f32 %v1351, %v1352
      %v1354 = vrot.slane %v1353, 2
      %v1355 = vadd.f32 %v1353, %v1354
      %v1356 = vrot.slane %v1355, 1
      %v1357 = vadd.f32 %v1355, %v1356
      %v1358 = vadd.f32 %v1219, %v1220
      %v1359 = vrot.slane %v1358, 4
      %v1360 = vadd.f32 %v1358, %v1359
      %v1361 = vrot.slane %v1360, 2
      %v1362 = vadd.f32 %v1360, %v1361
      %v1363 = vrot.slane %v1362, 1
      %v1364 = vadd.f32 %v1362, %v1363
      %v1365 = vadd.f32 %v1221, %v1222
      %v1366 = vrot.slane %v1365, 4
      %v1367 = vadd.f32 %v1365, %v1366
      %v1368 = vrot.slane %v1367, 2
      %v1369 = vadd.f32 %v1367, %v1368
      %v1370 = vrot.slane %v1369, 1
      %v1371 = vadd.f32 %v1369, %v1370
      %v1372 = vadd.f32 %v1223, %v1224
      %v1373 = vrot.slane %v1372, 4
      %v1374 = vadd.f32 %v1372, %v1373
      %v1375 = vrot.slane %v1374, 2
      %v1376 = vadd.f32 %v1374, %v1375
      %v1377 = vrot.slane %v1376, 1
      %v1378 = vadd.f32 %v1376, %v1377
      %v1379 = vadd.f32 %v1225, %v1226
      %v1380 = vrot.slane %v1379, 4
      %v1381 = vadd.f32 %v1379, %v1380
      %v1382 = vrot.slane %v1381, 2
      %v1383 = vadd.f32 %v1381, %v1382
      %v1384 = vrot.slane %v1383, 1
      %v1385 = vadd.f32 %v1383, %v1384
      %v1386 = vadd.f32 %v1227, %v1228
      %v1387 = vrot.slane %v1386, 4
      %v1388 = vadd.f32 %v1386, %v1387
      %v1389 = vrot.slane %v1388, 2
      %v1390 = vadd.f32 %v1388, %v1389
      %v1391 = vrot.slane %v1390, 1
      %v1392 = vadd.f32 %v1390, %v1391
      %v1393 = vadd.f32 %v1229, %v1230
      %v1394 = vrot.slane %v1393, 4
      %v1395 = vadd.f32 %v1393, %v1394
      %v1396 = vrot.slane %v1395, 2
      %v1397 = vadd.f32 %v1395, %v1396
      %v1398 = vrot.slane %v1397, 1
      %v1399 = vadd.f32 %v1397, %v1398
      %v1400 = vadd.f32 %v1231, %v1232
      %v1401 = vrot.slane %v1400, 4
      %v1402 = vadd.f32 %v1400, %v1401
      %v1403 = vrot.slane %v1402, 2
      %v1404 = vadd.f32 %v1402, %v1403
      %v1405 = vrot.slane %v1404, 1
      %v1406 = vadd.f32 %v1404, %v1405
      %v1407 = vadd.f32 %v1233, %v1234
      %v1408 = vrot.slane %v1407, 4
      %v1409 = vadd.f32 %v1407, %v1408
      %v1410 = vrot.slane %v1409, 2
      %v1411 = vadd.f32 %v1409, %v1410
      %v1412 = vrot.slane %v1411, 1
      %v1413 = vadd.f32 %v1411, %v1412
      %v1414 = vadd.f32 %v1235, %v1236
      %v1415 = vrot.slane %v1414, 4
      %v1416 = vadd.f32 %v1414, %v1415
      %v1417 = vrot.slane %v1416, 2
      %v1418 = vadd.f32 %v1416, %v1417
      %v1419 = vrot.slane %v1418, 1
      %v1420 = vadd.f32 %v1418, %v1419
      %v1421 = vadd.f32 %v1237, %v1238
      %v1422 = vrot.slane %v1421, 4
      %v1423 = vadd.f32 %v1421, %v1422
      %v1424 = vrot.slane %v1423, 2
      %v1425 = vadd.f32 %v1423, %v1424
      %v1426 = vrot.slane %v1425, 1
      %v1427 = vadd.f32 %v1425, %v1426
      %v1428 = vadd.f32 %v1239, %v1240
      %v1429 = vrot.slane %v1428, 4
      %v1430 = vadd.f32 %v1428, %v1429
      %v1431 = vrot.slane %v1430, 2
      %v1432 = vadd.f32 %v1430, %v1431
      %v1433 = vrot.slane %v1432, 1
      %v1434 = vadd.f32 %v1432, %v1433
      %v1435 = vadd.f32 %v1241, %v1242
      %v1436 = vrot.slane %v1435, 4
      %v1437 = vadd.f32 %v1435, %v1436
      %v1438 = vrot.slane %v1437, 2
      %v1439 = vadd.f32 %v1437, %v1438
      %v1440 = vrot.slane %v1439, 1
      %v1441 = vadd.f32 %v1439, %v1440
      %v1442 = vadd.f32 %v1243, %v1244
      %v1443 = vrot.slane %v1442, 4
      %v1444 = vadd.f32 %v1442, %v1443
      %v1445 = vrot.slane %v1444, 2
      %v1446 = vadd.f32 %v1444, %v1445
      %v1447 = vrot.slane %v1446, 1
      %v1448 = vadd.f32 %v1446, %v1447
      %v1449 = vadd.f32 %v1245, %v1246
      %v1450 = vrot.slane %v1449, 4
      %v1451 = vadd.f32 %v1449, %v1450
      %v1452 = vrot.slane %v1451, 2
      %v1453 = vadd.f32 %v1451, %v1452
      %v1454 = vrot.slane %v1453, 1
      %v1455 = vadd.f32 %v1453, %v1454
      %v1456 = vadd.f32 %v1247, %v1248
      %v1457 = vrot.slane %v1456, 4
      %v1458 = vadd.f32 %v1456, %v1457
      %v1459 = vrot.slane %v1458, 2
      %v1460 = vadd.f32 %v1458, %v1459
      %v1461 = vrot.slane %v1460, 1
      %v1462 = vadd.f32 %v1460, %v1461
      %v1463 = vadd.f32 %v1249, %v1250
      %v1464 = vrot.slane %v1463, 4
      %v1465 = vadd.f32 %v1463, %v1464
      %v1466 = vrot.slane %v1465, 2
      %v1467 = vadd.f32 %v1465, %v1466
      %v1468 = vrot.slane %v1467, 1
      %v1469 = vadd.f32 %v1467, %v1468
      %v1470 = vadd.f32 %v1251, %v1252
      %v1471 = vrot.slane %v1470, 4
      %v1472 = vadd.f32 %v1470, %v1471
      %v1473 = vrot.slane %v1472, 2
      %v1474 = vadd.f32 %v1472, %v1473
      %v1475 = vrot.slane %v1474, 1
      %v1476 = vadd.f32 %v1474, %v1475
      %v1477 = vrcp.pop 16.0
      %v1478 = vmul.f32 %v1259, %v1477
      %v1479 = vmul.f32 %v1266, %v1477
      %v1480 = vmul.f32 %v1273, %v1477
      %v1481 = vmul.f32 %v1280, %v1477
      %v1482 = vmul.f32 %v1287, %v1477
      %v1483 = vmul.f32 %v1294, %v1477
      %v1484 = vmul.f32 %v1301, %v1477
      %v1485 = vmul.f32 %v1308, %v1477
      %v1486 = vmul.f32 %v1315, %v1477
      %v1487 = vmul.f32 %v1322, %v1477
      %v1488 = vmul.f32 %v1329, %v1477
      %v1489 = vmul.f32 %v1336, %v1477
      %v1490 = vmul.f32 %v1343, %v1477
      %v1491 = vmul.f32 %v1350, %v1477
      %v1492 = vmul.f32 %v1357, %v1477
      %v1493 = vmul.f32 %v1364, %v1477
      %v1494 = vmul.f32 %v1371, %v1477
      %v1495 = vmul.f32 %v1378, %v1477
      %v1496 = vmul.f32 %v1385, %v1477
      %v1497 = vmul.f32 %v1392, %v1477
      %v1498 = vmul.f32 %v1399, %v1477
      %v1499 = vmul.f32 %v1406, %v1477
      %v1500 = vmul.f32 %v1413, %v1477
      %v1501 = vmul.f32 %v1420, %v1477
      %v1502 = vmul.f32 %v1427, %v1477
      %v1503 = vmul.f32 %v1434, %v1477
      %v1504 = vmul.f32 %v1441, %v1477
      %v1505 = vmul.f32 %v1448, %v1477
      %v1506 = vmul.f32 %v1455, %v1477
      %v1507 = vmul.f32 %v1462, %v1477
      %v1508 = vmul.f32 %v1469, %v1477
      %v1509 = vmul.f32 %v1476, %v1477
      %vm1542 = vcmask 1041409
      %v1543 = vsel %vm1542, %v1479, %v1478
      %vm1544 = vcmask 1042434
      %v1545 = vsel %vm1544, %v1480, %v1543
      %vm1546 = vcmask 1043459
      %v1547 = vsel %vm1546, %v1481, %v1545
      %vm1548 = vcmask 1044484
      %v1549 = vsel %vm1548, %v1482, %v1547
      %vm1550 = vcmask 1045509
      %v1551 = vsel %vm1550, %v1483, %v1549
      %vm1552 = vcmask 1046534
      %v1553 = vsel %vm1552, %v1484, %v1551
      %vm1554 = vcmask 1047559
      %v1555 = vsel %vm1554, %v1485, %v1553
      %v1556 = vsel %vm1542, %v1487, %v1486
      %v1557 = vsel %vm1544, %v1488, %v1556
      %v1558 = vsel %vm1546, %v1489, %v1557
      %v1559 = vsel %vm1548, %v1490, %v1558
      %v1560 = vsel %vm1550, %v1491, %v1559
      %v1561 = vsel %vm1552, %v1492, %v1560
      %v1562 = vsel %vm1554, %v1493, %v1561
      %v1563 = vsel %vm1542, %v1495, %v1494
      %v1564 = vsel %vm1544, %v1496, %v1563
      %v1565 = vsel %vm1546, %v1497, %v1564
      %v1566 = vsel %vm1548, %v1498, %v1565
      %v1567 = vsel %vm1550, %v1499, %v1566
      %v1568 = vsel %vm1552, %v1500, %v1567
      %v1569 = vsel %vm1554, %v1501, %v1568
      %v1570 = vsel %vm1542, %v1503, %v1502
      %v1571 = vsel %vm1544, %v1504, %v1570
      %v1572 = vsel %vm1546, %v1505, %v1571
      %v1573 = vsel %vm1548, %v1506, %v1572
      %v1574 = vsel %vm1550, %v1507, %v1573
      %v1575 = vsel %vm1552, %v1508, %v1574
      %v1576 = vsel %vm1554, %v1509, %v1575
      %1581 = vst [vmem:[%s531] sm:$0xff] %v1555
      %1582 = vst [vmem:[%s531 + $0x8] sm:$0xff] %v1562
      %1583 = vst [vmem:[%s531 + $0x10] sm:$0xff] %v1569
      %1584 = vst [vmem:[%s531 + $0x18] sm:$0xff] %v1576
      %v1585 = vpack.c.bf16 %v1478, %v1478
      %v1586 = vpack.c.bf16 %v1479, %v1479
      %v1587 = vpack.c.bf16 %v1480, %v1480
      %v1588 = vpack.c.bf16 %v1481, %v1481
      %v1589 = vpack.c.bf16 %v1482, %v1482
      %v1590 = vpack.c.bf16 %v1483, %v1483
      %v1591 = vpack.c.bf16 %v1484, %v1484
      %v1592 = vpack.c.bf16 %v1485, %v1485
      %v1593 = vpack.c.bf16 %v1486, %v1486
      %v1594 = vpack.c.bf16 %v1487, %v1487
      %v1595 = vpack.c.bf16 %v1488, %v1488
      %v1596 = vpack.c.bf16 %v1489, %v1489
      %v1597 = vpack.c.bf16 %v1490, %v1490
      %v1598 = vpack.c.bf16 %v1491, %v1491
      %v1599 = vpack.c.bf16 %v1492, %v1492
      %v1600 = vpack.c.bf16 %v1493, %v1493
      %v1601 = vpack.c.bf16 %v1494, %v1494
      %v1602 = vpack.c.bf16 %v1495, %v1495
      %v1603 = vpack.c.bf16 %v1496, %v1496
      %v1604 = vpack.c.bf16 %v1497, %v1497
      %v1605 = vpack.c.bf16 %v1498, %v1498
      %v1606 = vpack.c.bf16 %v1499, %v1499
      %v1607 = vpack.c.bf16 %v1500, %v1500
      %v1608 = vpack.c.bf16 %v1501, %v1501
      %v1609 = vpack.c.bf16 %v1502, %v1502
      %v1610 = vpack.c.bf16 %v1503, %v1503
      %v1611 = vpack.c.bf16 %v1504, %v1504
      %v1612 = vpack.c.bf16 %v1505, %v1505
      %v1613 = vpack.c.bf16 %v1506, %v1506
      %v1614 = vpack.c.bf16 %v1507, %v1507
      %v1615 = vpack.c.bf16 %v1508, %v1508
      %v1616 = vpack.c.bf16 %v1509, %v1509
      %v1617 = vld [vmem:[%s3] sm:$0xf]
      %v1618 = vld [vmem:[%s3 + $0x4] sm:$0xf]
      %v1619 = vld [vmem:[%s3 + $0x8] sm:$0xf]
      %v1620 = vld [vmem:[%s3 + $0xc] sm:$0xf]
      %v1621 = vld [vmem:[%s3 + $0x10] sm:$0xf]
      %v1622 = vld [vmem:[%s3 + $0x14] sm:$0xf]
      %v1623 = vld [vmem:[%s3 + $0x18] sm:$0xf]
      %v1624 = vld [vmem:[%s3 + $0x1c] sm:$0xf]
      %v1625 = vld [vmem:[%s3 + $0x20] sm:$0xf]
      %v1626 = vld [vmem:[%s3 + $0x24] sm:$0xf]
      %v1627 = vld [vmem:[%s3 + $0x28] sm:$0xf]
      %v1628 = vld [vmem:[%s3 + $0x2c] sm:$0xf]
      %v1629 = vld [vmem:[%s3 + $0x30] sm:$0xf]
      %v1630 = vld [vmem:[%s3 + $0x34] sm:$0xf]
      %v1631 = vld [vmem:[%s3 + $0x38] sm:$0xf]
      %v1632 = vld [vmem:[%s3 + $0x3c] sm:$0xf]
      %v1633 = vld [vmem:[%s9] sm:$0x1]
      %v1635 = vlaneseq
      %v1636 = vshrl.u32 %v1635, 7
      %v1637 = vsub.s32 0, %v1636
      %v1638 = vrot.slane %v1633, %v1637
      %v1672 = vunpack.c.l.b16 %v1585
      %v1673 = vunpack.c.l.b16 %v1586
      %v1674 = vunpack.c.l.b16 %v1587
      %v1675 = vunpack.c.l.b16 %v1588
      %v1676 = vunpack.c.l.b16 %v1589
      %v1677 = vunpack.c.l.b16 %v1590
      %v1678 = vunpack.c.l.b16 %v1591
      %v1679 = vunpack.c.l.b16 %v1592
      %v1680 = vunpack.c.l.b16 %v1593
      %v1681 = vunpack.c.l.b16 %v1594
      %v1682 = vunpack.c.l.b16 %v1595
      %v1683 = vunpack.c.l.b16 %v1596
      %v1684 = vunpack.c.l.b16 %v1597
      %v1685 = vunpack.c.l.b16 %v1598
      %v1686 = vunpack.c.l.b16 %v1599
      %v1687 = vunpack.c.l.b16 %v1600
      %v1688 = vunpack.c.l.b16 %v1601
      %v1689 = vunpack.c.l.b16 %v1602
      %v1690 = vunpack.c.l.b16 %v1603
      %v1691 = vunpack.c.l.b16 %v1604
      %v1692 = vunpack.c.l.b16 %v1605
      %v1693 = vunpack.c.l.b16 %v1606
      %v1694 = vunpack.c.l.b16 %v1607
      %v1695 = vunpack.c.l.b16 %v1608
      %v1696 = vunpack.c.l.b16 %v1609
      %v1697 = vunpack.c.l.b16 %v1610
      %v1698 = vunpack.c.l.b16 %v1611
      %v1699 = vunpack.c.l.b16 %v1612
      %v1700 = vunpack.c.l.b16 %v1613
      %v1701 = vunpack.c.l.b16 %v1614
      %v1702 = vunpack.c.l.b16 %v1615
      %v1703 = vunpack.c.l.b16 %v1616
      %v1704 = vsel %vm1542, %v1673, %v1672
      %v1705 = vsel %vm1544, %v1674, %v1704
      %v1706 = vsel %vm1546, %v1675, %v1705
      %v1707 = vsel %vm1548, %v1676, %v1706
      %v1708 = vsel %vm1550, %v1677, %v1707
      %v1709 = vsel %vm1552, %v1678, %v1708
      %v1710 = vsel %vm1554, %v1679, %v1709
      %v1711 = vsel %vm1542, %v1681, %v1680
      %v1712 = vsel %vm1544, %v1682, %v1711
      %v1713 = vsel %vm1546, %v1683, %v1712
      %v1714 = vsel %vm1548, %v1684, %v1713
      %v1715 = vsel %vm1550, %v1685, %v1714
      %v1716 = vsel %vm1552, %v1686, %v1715
      %v1717 = vsel %vm1554, %v1687, %v1716
      %v1718 = vsel %vm1542, %v1689, %v1688
      %v1719 = vsel %vm1544, %v1690, %v1718
      %v1720 = vsel %vm1546, %v1691, %v1719
      %v1721 = vsel %vm1548, %v1692, %v1720
      %v1722 = vsel %vm1550, %v1693, %v1721
      %v1723 = vsel %vm1552, %v1694, %v1722
      %v1724 = vsel %vm1554, %v1695, %v1723
      %v1725 = vsel %vm1542, %v1697, %v1696
      %v1726 = vsel %vm1544, %v1698, %v1725
      %v1727 = vsel %vm1546, %v1699, %v1726
      %v1728 = vsel %vm1548, %v1700, %v1727
      %v1729 = vsel %vm1550, %v1701, %v1728
      %v1730 = vsel %vm1552, %v1702, %v1729
      %v1731 = vsel %vm1554, %v1703, %v1730
      %v1732 = vpack.c.b16 %v1717, %v1710
      %v1733 = vpack.c.b16 %v1731, %v1724
      %v1752 = vunpack.c.l.b16 %v1617
      %v1753 = vunpack.c.l.b16 %v1618
      %v1754 = vunpack.c.l.b16 %v1619
      %v1755 = vunpack.c.l.b16 %v1620
      %v1756 = vunpack.c.l.b16 %v1621
      %v1757 = vunpack.c.l.b16 %v1622
      %v1758 = vunpack.c.l.b16 %v1623
      %v1759 = vunpack.c.l.b16 %v1624
      %v1760 = vunpack.c.l.b16 %v1625
      %v1761 = vunpack.c.l.b16 %v1626
      %v1762 = vunpack.c.l.b16 %v1627
      %v1763 = vunpack.c.l.b16 %v1628
      %v1764 = vunpack.c.l.b16 %v1629
      %v1765 = vunpack.c.l.b16 %v1630
      %v1766 = vunpack.c.l.b16 %v1631
      %v1767 = vunpack.c.l.b16 %v1632
      %v1768 = vpack.c.b16 %v1753, %v1752
      %v1769 = vpack.c.b16 %v1755, %v1754
      %v1770 = vpack.c.b16 %v1757, %v1756
      %v1771 = vpack.c.b16 %v1759, %v1758
      %v1772 = vpack.c.b16 %v1761, %v1760
      %v1773 = vpack.c.b16 %v1763, %v1762
      %v1774 = vpack.c.b16 %v1765, %v1764
      %v1775 = vpack.c.b16 %v1767, %v1766
      %1784 = vmatprep.subr.bf16.mxu0 0
      %1785 = vmatpush1.bf16.msra.mxu0 %v1768
      %1786 = vmatprep.subr.bf16.mxu0 0
      %1787 = vmatpush1.bf16.msra.mxu0 %v1769
      %1788 = vmatprep.subr.bf16.mxu0 0
      %1789 = vmatpush1.bf16.msra.mxu0 %v1770
      %1790 = vmatprep.subr.bf16.mxu0 0
      %1791 = vmatpush1.bf16.msra.mxu0 %v1771
      %1792 = vmatprep.subr.bf16.mxu0 0
      %1793 = vmatpush1.bf16.msra.mxu0 %v1772
      %1794 = vmatprep.subr.bf16.mxu0 0
      %1795 = vmatpush1.bf16.msra.mxu0 %v1773
      %1796 = vmatprep.subr.bf16.mxu0 0
      %1797 = vmatpush1.bf16.msra.mxu0 %v1774
      %1798 = vmatprep.subr.bf16.mxu0 0
      %1799 = vmatpush1.bf16.msra.mxu0 %v1775
      %1800 = vmatprep.subr.bf16.mxu0 0
      %1801 = vmatpush1.bf16.msra.mxu0 0
      %1802 = vmatprep.subr.bf16.mxu0 0
      %1803 = vmatpush1.bf16.msra.mxu0 0
      %1804 = vmatprep.subr.bf16.mxu0 0
      %1805 = vmatpush1.bf16.msra.mxu0 0
      %1806 = vmatprep.subr.bf16.mxu0 0
      %1807 = vmatpush1.bf16.msra.mxu0 0
      %1808 = vmatprep.subr.bf16.mxu0 0
      %1809 = vmatpush1.bf16.msra.mxu0 0
      %1810 = vmatprep.subr.bf16.mxu0 0
      %1811 = vmatpush1.bf16.msra.mxu0 0
      %1812 = vmatprep.subr.bf16.mxu0 0
      %1813 = vmatpush1.bf16.msra.mxu0 0
      %1814 = vmatprep.subr.bf16.mxu0 0
      %1815 = vmatpush1.bf16.msra.mxu0 0
      %1816 = vmatprep.mubr.bf16.mxu0 0
      %1817 = vmatmul.mubr.bf16.gmra.mrb[0].mxu0 %v1732
      %v1818 = vpop.f32.mrb[0].mxu0
      %v1819 = vadd.f32 %v1638, %v1818
      %v1820 = vpop.f32.mrb[0].mxu0
      %v1821 = vpop.f32.mrb[0].mxu0
      %v1822 = vadd.f32 %v1638, %v1821
      %v1823 = vpop.f32.mrb[0].mxu0
      %1824 = vmatprep.mubr.bf16.mxu0 0
      %1825 = vmatmul.mubr.bf16.gmra.mrb[0].mxu0 %v1733
      %v1826 = vpop.f32.mrb[0].mxu0
      %v1827 = vadd.f32 %v1638, %v1826
      %v1828 = vpop.f32.mrb[0].mxu0
      %v1829 = vpop.f32.mrb[0].mxu0
      %v1830 = vadd.f32 %v1638, %v1829
      %v1831 = vpop.f32.mrb[0].mxu0
      %1832 = vdwg.mxu0
      %v1833 = vmax.f32 %v1819, 0.0
      %v1834 = vmax.f32 %v1822, 0.0
      %v1835 = vmax.f32 %v1827, 0.0
      %v1836 = vmax.f32 %v1830, 0.0
      %v1837 = vpack.c.bf16 %v1834, %v1833
      %v1838 = vpack.c.bf16 %v1836, %v1835
      %v1839 = vld [vmem:[%s4] sm:$0xf]
      %v1840 = vld [vmem:[%s4 + $0x4] sm:$0xf]
      %v1841 = vld [vmem:[%s4 + $0x8] sm:$0xf]
      %v1842 = vld [vmem:[%s4 + $0xc] sm:$0xf]
      %v1843 = vld [vmem:[%s4 + $0x10] sm:$0xf]
      %v1844 = vld [vmem:[%s4 + $0x14] sm:$0xf]
      %v1845 = vld [vmem:[%s4 + $0x18] sm:$0xf]
      %v1846 = vld [vmem:[%s4 + $0x1c] sm:$0xf]
      %v1847 = vld [vmem:[%s4 + $0x20] sm:$0xf]
      %v1848 = vld [vmem:[%s4 + $0x24] sm:$0xf]
      %v1849 = vld [vmem:[%s4 + $0x28] sm:$0xf]
      %v1850 = vld [vmem:[%s4 + $0x2c] sm:$0xf]
      %v1851 = vld [vmem:[%s10] sm:$0x1]
      %v1853 = vlaneseq
      %v1854 = vshrl.u32 %v1853, 7
      %v1855 = vsub.s32 0, %v1854
      %v1856 = vrot.slane %v1851, %v1855
      %v1870 = vunpack.c.l.b16 %v1839
      %v1871 = vunpack.c.l.b16 %v1840
      %v1872 = vunpack.c.l.b16 %v1841
      %v1873 = vunpack.c.l.b16 %v1842
      %v1874 = vunpack.c.l.b16 %v1843
      %v1875 = vunpack.c.l.b16 %v1844
      %v1876 = vunpack.c.l.b16 %v1845
      %v1877 = vunpack.c.l.b16 %v1846
      %v1878 = vunpack.c.l.b16 %v1847
      %v1879 = vunpack.c.l.b16 %v1848
      %v1880 = vunpack.c.l.b16 %v1849
      %v1881 = vunpack.c.l.b16 %v1850
      %v1882 = vpack.c.b16 %v1871, %v1870
      %v1883 = vpack.c.b16 %v1873, %v1872
      %v1884 = vpack.c.b16 %v1875, %v1874
      %v1885 = vpack.c.b16 %v1877, %v1876
      %v1886 = vpack.c.b16 %v1879, %v1878
      %v1887 = vpack.c.b16 %v1881, %v1880
      %vm1894 = vcmask 785408
      %v1896 = vsel %vm1894, %v1837, 0
      %v1899 = vsel %vm1894, %v1838, 0
      %1901 = vmatprep.subr.bf16.mxu0 0
      %1902 = vmatpush1.bf16.msra.mxu0 %v1882
      %1903 = vmatprep.subr.bf16.mxu0 0
      %1904 = vmatpush1.bf16.msra.mxu0 %v1883
      %1905 = vmatprep.subr.bf16.mxu0 0
      %1906 = vmatpush1.bf16.msra.mxu0 %v1884
      %1907 = vmatprep.subr.bf16.mxu0 0
      %1908 = vmatpush1.bf16.msra.mxu0 %v1885
      %1909 = vmatprep.subr.bf16.mxu0 0
      %1910 = vmatpush1.bf16.msra.mxu0 %v1886
      %1911 = vmatprep.subr.bf16.mxu0 0
      %1912 = vmatpush1.bf16.msra.mxu0 %v1887
      %1913 = vmatprep.subr.bf16.mxu0 0
      %1914 = vmatpush1.bf16.msra.mxu0 0
      %1915 = vmatprep.subr.bf16.mxu0 0
      %1916 = vmatpush1.bf16.msra.mxu0 0
      %1917 = vmatprep.subr.bf16.mxu0 0
      %1918 = vmatpush1.bf16.msra.mxu0 0
      %1919 = vmatprep.subr.bf16.mxu0 0
      %1920 = vmatpush1.bf16.msra.mxu0 0
      %1921 = vmatprep.subr.bf16.mxu0 0
      %1922 = vmatpush1.bf16.msra.mxu0 0
      %1923 = vmatprep.subr.bf16.mxu0 0
      %1924 = vmatpush1.bf16.msra.mxu0 0
      %1925 = vmatprep.subr.bf16.mxu0 0
      %1926 = vmatpush1.bf16.msra.mxu0 0
      %1927 = vmatprep.subr.bf16.mxu0 0
      %1928 = vmatpush1.bf16.msra.mxu0 0
      %1929 = vmatprep.subr.bf16.mxu0 0
      %1930 = vmatpush1.bf16.msra.mxu0 0
      %1931 = vmatprep.subr.bf16.mxu0 0
      %1932 = vmatpush1.bf16.msra.mxu0 0
      %1933 = vmatprep.mubr.bf16.mxu0 0
      %1934 = vmatmul.mubr.bf16.gmra.mrb[0].mxu0 %v1896
      %v1935 = vpop.f32.mrb[0].mxu0
      %v1936 = vadd.f32 %v1856, %v1935
      %v1937 = vpop.f32.mrb[0].mxu0
      %v1938 = vpop.f32.mrb[0].mxu0
      %v1939 = vadd.f32 %v1856, %v1938
      %v1940 = vpop.f32.mrb[0].mxu0
      %1941 = vmatprep.mubr.bf16.mxu0 0
      %1942 = vmatmul.mubr.bf16.gmra.mrb[0].mxu0 %v1899
      %v1943 = vpop.f32.mrb[0].mxu0
      %v1944 = vadd.f32 %v1856, %v1943
      %v1945 = vpop.f32.mrb[0].mxu0
      %v1946 = vpop.f32.mrb[0].mxu0
      %v1947 = vadd.f32 %v1856, %v1946
      %v1948 = vpop.f32.mrb[0].mxu0
      %1949 = vdwg.mxu0
      %v1950 = vmax.f32 %v1936, 0.0
      %v1951 = vmax.f32 %v1939, 0.0
      %v1952 = vmax.f32 %v1944, 0.0
      %v1953 = vmax.f32 %v1947, 0.0
      %v1954 = vpack.c.bf16 %v1951, %v1950
      %v1955 = vpack.c.bf16 %v1953, %v1952
      %v1956 = vld [vmem:[%s5] sm:$0xf]
      %v1957 = vld [vmem:[%s5 + $0x4] sm:$0xf]
      %v1958 = vld [vmem:[%s5 + $0x8] sm:$0xf]
      %v1959 = vld [vmem:[%s5 + $0xc] sm:$0xf]
      %v1960 = vld [vmem:[%s5 + $0x10] sm:$0xf]
      %v1961 = vld [vmem:[%s5 + $0x14] sm:$0xf]
      %v1962 = vld [vmem:[%s5 + $0x18] sm:$0xf]
      %v1963 = vld [vmem:[%s5 + $0x1c] sm:$0xf]
      %v1964 = vld [vmem:[%s11] sm:$0x1]
      %v1966 = vlaneseq
      %v1967 = vshrl.u32 %v1966, 7
      %v1968 = vsub.s32 0, %v1967
      %v1969 = vrot.slane %v1964, %v1968
      %v1979 = vunpack.c.l.b16 %v1956
      %v1980 = vunpack.c.l.b16 %v1957
      %v1981 = vunpack.c.l.b16 %v1958
      %v1982 = vunpack.c.l.b16 %v1959
      %v1983 = vunpack.c.l.b16 %v1960
      %v1984 = vunpack.c.l.b16 %v1961
      %v1985 = vunpack.c.l.b16 %v1962
      %v1986 = vunpack.c.l.b16 %v1963
      %v1987 = vpack.c.b16 %v1980, %v1979
      %v1988 = vpack.c.b16 %v1982, %v1981
      %v1989 = vpack.c.b16 %v1984, %v1983
      %v1990 = vpack.c.b16 %v1986, %v1985
      %v1996 = vsel %vm803, %v1954, 0
      %v1999 = vsel %vm803, %v1955, 0
      %2001 = vmatprep.subr.bf16.mxu0 0
      %2002 = vmatpush1.bf16.msra.mxu0 %v1987
      %2003 = vmatprep.subr.bf16.mxu0 0
      %2004 = vmatpush1.bf16.msra.mxu0 %v1988
      %2005 = vmatprep.subr.bf16.mxu0 0
      %2006 = vmatpush1.bf16.msra.mxu0 %v1989
      %2007 = vmatprep.subr.bf16.mxu0 0
      %2008 = vmatpush1.bf16.msra.mxu0 %v1990
      %2009 = vmatprep.subr.bf16.mxu0 0
      %2010 = vmatpush1.bf16.msra.mxu0 0
      %2011 = vmatprep.subr.bf16.mxu0 0
      %2012 = vmatpush1.bf16.msra.mxu0 0
      %2013 = vmatprep.subr.bf16.mxu0 0
      %2014 = vmatpush1.bf16.msra.mxu0 0
      %2015 = vmatprep.subr.bf16.mxu0 0
      %2016 = vmatpush1.bf16.msra.mxu0 0
      %2017 = vmatprep.subr.bf16.mxu0 0
      %2018 = vmatpush1.bf16.msra.mxu0 0
      %2019 = vmatprep.subr.bf16.mxu0 0
      %2020 = vmatpush1.bf16.msra.mxu0 0
      %2021 = vmatprep.subr.bf16.mxu0 0
      %2022 = vmatpush1.bf16.msra.mxu0 0
      %2023 = vmatprep.subr.bf16.mxu0 0
      %2024 = vmatpush1.bf16.msra.mxu0 0
      %2025 = vmatprep.subr.bf16.mxu0 0
      %2026 = vmatpush1.bf16.msra.mxu0 0
      %2027 = vmatprep.subr.bf16.mxu0 0
      %2028 = vmatpush1.bf16.msra.mxu0 0
      %2029 = vmatprep.subr.bf16.mxu0 0
      %2030 = vmatpush1.bf16.msra.mxu0 0
      %2031 = vmatprep.subr.bf16.mxu0 0
      %2032 = vmatpush1.bf16.msra.mxu0 0
      %2033 = vmatprep.mubr.bf16.mxu0 0
      %2034 = vmatmul.mubr.bf16.gmra.mrb[0].mxu0 %v1996
      %v2035 = vpop.f32.mrb[0].mxu0
      %v2036 = vadd.f32 %v1969, %v2035
      %v2037 = vpop.f32.mrb[0].mxu0
      %v2038 = vpop.f32.mrb[0].mxu0
      %v2039 = vadd.f32 %v1969, %v2038
      %v2040 = vpop.f32.mrb[0].mxu0
      %2041 = vmatprep.mubr.bf16.mxu0 0
      %2042 = vmatmul.mubr.bf16.gmra.mrb[0].mxu0 %v1999
      %v2043 = vpop.f32.mrb[0].mxu0
      %v2044 = vadd.f32 %v1969, %v2043
      %v2045 = vpop.f32.mrb[0].mxu0
      %v2046 = vpop.f32.mrb[0].mxu0
      %v2047 = vadd.f32 %v1969, %v2046
      %v2048 = vpop.f32.mrb[0].mxu0
      %2049 = vdwg.mxu0
      %v2050 = vpack.c.bf16 %v2039, %v2036
      %v2051 = vpack.c.bf16 %v2047, %v2044
      %v2052 = vld [vmem:[%s6] sm:$0xf]
      %v2053 = vld [vmem:[%s6 + $0x4] sm:$0xf]
      %v2054 = vld [vmem:[%s6 + $0x8] sm:$0xf]
      %v2055 = vld [vmem:[%s6 + $0xc] sm:$0xf]
      %v2056 = vld [vmem:[%s12] sm:$0x1]
      %v2058 = vlaneseq
      %v2059 = vshrl.u32 %v2058, 7
      %v2060 = vsub.s32 0, %v2059
      %v2061 = vrot.slane %v2056, %v2060
      %v2067 = vunpack.c.l.b16 %v2052
      %v2068 = vunpack.c.l.b16 %v2053
      %v2069 = vunpack.c.l.b16 %v2054
      %v2070 = vunpack.c.l.b16 %v2055
      %v2071 = vpack.c.b16 %v2068, %v2067
      %v2072 = vpack.c.b16 %v2070, %v2069
      %vm2075 = vcmask 261120
      %v2077 = vsel %vm2075, %v2050, 0
      %v2080 = vsel %vm2075, %v2051, 0
      %2082 = vmatprep.subr.bf16.mxu0 0
      %2083 = vmatpush1.bf16.msra.mxu0 %v2071
      %2084 = vmatprep.subr.bf16.mxu0 0
      %2085 = vmatpush1.bf16.msra.mxu0 %v2072
      %2086 = vmatprep.subr.bf16.mxu0 0
      %2087 = vmatpush1.bf16.msra.mxu0 0
      %2088 = vmatprep.subr.bf16.mxu0 0
      %2089 = vmatpush1.bf16.msra.mxu0 0
      %2090 = vmatprep.subr.bf16.mxu0 0
      %2091 = vmatpush1.bf16.msra.mxu0 0
      %2092 = vmatprep.subr.bf16.mxu0 0
      %2093 = vmatpush1.bf16.msra.mxu0 0
      %2094 = vmatprep.subr.bf16.mxu0 0
      %2095 = vmatpush1.bf16.msra.mxu0 0
      %2096 = vmatprep.subr.bf16.mxu0 0
      %2097 = vmatpush1.bf16.msra.mxu0 0
      %2098 = vmatprep.subr.bf16.mxu0 0
      %2099 = vmatpush1.bf16.msra.mxu0 0
      %2100 = vmatprep.subr.bf16.mxu0 0
      %2101 = vmatpush1.bf16.msra.mxu0 0
      %2102 = vmatprep.subr.bf16.mxu0 0
      %2103 = vmatpush1.bf16.msra.mxu0 0
      %2104 = vmatprep.subr.bf16.mxu0 0
      %2105 = vmatpush1.bf16.msra.mxu0 0
      %2106 = vmatprep.subr.bf16.mxu0 0
      %2107 = vmatpush1.bf16.msra.mxu0 0
      %2108 = vmatprep.subr.bf16.mxu0 0
      %2109 = vmatpush1.bf16.msra.mxu0 0
      %2110 = vmatprep.subr.bf16.mxu0 0
      %2111 = vmatpush1.bf16.msra.mxu0 0
      %2112 = vmatprep.subr.bf16.mxu0 0
      %2113 = vmatpush1.bf16.msra.mxu0 0
      %2114 = vmatprep.mubr.bf16.mxu0 0
      %2115 = vmatmul.mubr.bf16.gmra.mrb[0].mxu0 %v2077
      %v2116 = vpop.f32.mrb[0].mxu0
      %v2117 = vadd.f32 %v2061, %v2116
      %v2118 = vpop.f32.mrb[0].mxu0
      %v2119 = vpop.f32.mrb[0].mxu0
      %v2120 = vadd.f32 %v2061, %v2119
      %v2121 = vpop.f32.mrb[0].mxu0
      %2122 = vmatprep.mubr.bf16.mxu0 0
      %2123 = vmatmul.mubr.bf16.gmra.mrb[0].mxu0 %v2080
      %v2124 = vpop.f32.mrb[0].mxu0
      %v2125 = vadd.f32 %v2061, %v2124
      %v2126 = vpop.f32.mrb[0].mxu0
      %v2127 = vpop.f32.mrb[0].mxu0
      %v2128 = vadd.f32 %v2061, %v2127
      %v2129 = vpop.f32.mrb[0].mxu0
      %2130 = vdwg.mxu0
      %v2131 = vmax.f32 %v2117, 0.0
      %v2132 = vmax.f32 %v2120, 0.0
      %v2133 = vmax.f32 %v2125, 0.0
      %v2134 = vmax.f32 %v2128, 0.0
      %v2135 = vpack.c.bf16 %v2132, %v2131
      %v2136 = vpack.c.bf16 %v2134, %v2133
      %v2137 = vld [vmem:[%s7] sm:$0xf]
      %v2138 = vld [vmem:[%s7 + $0x4] sm:$0xf]
      %v2139 = vld [vmem:[%s7 + $0x8] sm:$0xf]
      %v2140 = vld [vmem:[%s7 + $0xc] sm:$0xf]
      %v2141 = vld [vmem:[%s7 + $0x10] sm:$0xf]
      %v2142 = vld [vmem:[%s7 + $0x14] sm:$0xf]
      %v2143 = vld [vmem:[%s7 + $0x18] sm:$0xf]
      %v2144 = vld [vmem:[%s7 + $0x1c] sm:$0xf]
      %v2145 = vld [vmem:[%s13] sm:$0x1]
      %v2147 = vlaneseq
      %v2148 = vshrl.u32 %v2147, 7
      %v2149 = vsub.s32 0, %v2148
      %v2150 = vrot.slane %v2145, %v2149
      %v2160 = vunpack.c.l.b16 %v2137
      %v2161 = vunpack.c.l.b16 %v2138
      %v2162 = vunpack.c.l.b16 %v2139
      %v2163 = vunpack.c.l.b16 %v2140
      %v2164 = vunpack.c.l.b16 %v2141
      %v2165 = vunpack.c.l.b16 %v2142
      %v2166 = vunpack.c.l.b16 %v2143
      %v2167 = vunpack.c.l.b16 %v2144
      %v2168 = vpack.c.b16 %v2161, %v2160
      %v2169 = vpack.c.b16 %v2163, %v2162
      %v2170 = vpack.c.b16 %v2165, %v2164
      %v2171 = vpack.c.b16 %v2167, %v2166
      %v2177 = vsel %vm803, %v2135, 0
      %v2180 = vsel %vm803, %v2136, 0
      %2182 = vmatprep.subr.bf16.mxu0 0
      %2183 = vmatpush1.bf16.msra.mxu0 %v2168
      %2184 = vmatprep.subr.bf16.mxu0 0
      %2185 = vmatpush1.bf16.msra.mxu0 %v2169
      %2186 = vmatprep.subr.bf16.mxu0 0
      %2187 = vmatpush1.bf16.msra.mxu0 %v2170
      %2188 = vmatprep.subr.bf16.mxu0 0
      %2189 = vmatpush1.bf16.msra.mxu0 %v2171
      %2190 = vmatprep.subr.bf16.mxu0 0
      %2191 = vmatpush1.bf16.msra.mxu0 0
      %2192 = vmatprep.subr.bf16.mxu0 0
      %2193 = vmatpush1.bf16.msra.mxu0 0
      %2194 = vmatprep.subr.bf16.mxu0 0
      %2195 = vmatpush1.bf16.msra.mxu0 0
      %2196 = vmatprep.subr.bf16.mxu0 0
      %2197 = vmatpush1.bf16.msra.mxu0 0
      %2198 = vmatprep.subr.bf16.mxu0 0
      %2199 = vmatpush1.bf16.msra.mxu0 0
      %2200 = vmatprep.subr.bf16.mxu0 0
      %2201 = vmatpush1.bf16.msra.mxu0 0
      %2202 = vmatprep.subr.bf16.mxu0 0
      %2203 = vmatpush1.bf16.msra.mxu0 0
      %2204 = vmatprep.subr.bf16.mxu0 0
      %2205 = vmatpush1.bf16.msra.mxu0 0
      %2206 = vmatprep.subr.bf16.mxu0 0
      %2207 = vmatpush1.bf16.msra.mxu0 0
      %2208 = vmatprep.subr.bf16.mxu0 0
      %2209 = vmatpush1.bf16.msra.mxu0 0
      %2210 = vmatprep.subr.bf16.mxu0 0
      %2211 = vmatpush1.bf16.msra.mxu0 0
      %2212 = vmatprep.subr.bf16.mxu0 0
      %2213 = vmatpush1.bf16.msra.mxu0 0
      %2214 = vmatprep.mubr.bf16.mxu0 0
      %2215 = vmatmul.mubr.bf16.gmra.mrb[0].mxu0 %v2177
      %v2216 = vpop.f32.mrb[0].mxu0
      %v2217 = vadd.f32 %v2150, %v2216
      %v2218 = vpop.f32.mrb[0].mxu0
      %v2219 = vpop.f32.mrb[0].mxu0
      %v2220 = vadd.f32 %v2150, %v2219
      %v2221 = vpop.f32.mrb[0].mxu0
      %2222 = vmatprep.mubr.bf16.mxu0 0
      %2223 = vmatmul.mubr.bf16.gmra.mrb[0].mxu0 %v2180
      %v2224 = vpop.f32.mrb[0].mxu0
      %v2225 = vadd.f32 %v2150, %v2224
      %v2226 = vpop.f32.mrb[0].mxu0
      %v2227 = vpop.f32.mrb[0].mxu0
      %v2228 = vadd.f32 %v2150, %v2227
      %v2229 = vpop.f32.mrb[0].mxu0
      %2230 = vdwg.mxu0
      %v2231 = vmax.f32 %v2217, 0.0
      %v2232 = vmax.f32 %v2220, 0.0
      %v2233 = vmax.f32 %v2225, 0.0
      %v2234 = vmax.f32 %v2228, 0.0
      %v2235 = vpack.c.bf16 %v2232, %v2231
      %v2236 = vpack.c.bf16 %v2234, %v2233
      %v2237 = vld [vmem:[%s8] sm:$0xf]
      %v2238 = vld [vmem:[%s8 + $0x4] sm:$0xf]
      %v2239 = vld [vmem:[%s8 + $0x8] sm:$0xf]
      %v2240 = vld [vmem:[%s8 + $0xc] sm:$0xf]
      %v2241 = vld [vmem:[%s8 + $0x10] sm:$0xf]
      %v2242 = vld [vmem:[%s8 + $0x14] sm:$0xf]
      %v2243 = vld [vmem:[%s8 + $0x18] sm:$0xf]
      %v2244 = vld [vmem:[%s8 + $0x1c] sm:$0xf]
      %v2245 = vld [vmem:[%s8 + $0x20] sm:$0xf]
      %v2246 = vld [vmem:[%s8 + $0x24] sm:$0xf]
      %v2247 = vld [vmem:[%s8 + $0x28] sm:$0xf]
      %v2248 = vld [vmem:[%s8 + $0x2c] sm:$0xf]
      %v2249 = vld [vmem:[%s14] sm:$0x1]
      %v2251 = vlaneseq
      %v2252 = vshrl.u32 %v2251, 7
      %v2253 = vsub.s32 0, %v2252
      %v2254 = vrot.slane %v2249, %v2253
      %v2268 = vunpack.c.l.b16 %v2237
      %v2269 = vunpack.c.l.b16 %v2238
      %v2270 = vunpack.c.l.b16 %v2239
      %v2271 = vunpack.c.l.b16 %v2240
      %v2272 = vunpack.c.l.b16 %v2241
      %v2273 = vunpack.c.l.b16 %v2242
      %v2274 = vunpack.c.l.b16 %v2243
      %v2275 = vunpack.c.l.b16 %v2244
      %v2276 = vunpack.c.l.b16 %v2245
      %v2277 = vunpack.c.l.b16 %v2246
      %v2278 = vunpack.c.l.b16 %v2247
      %v2279 = vunpack.c.l.b16 %v2248
      %v2280 = vpack.c.b16 %v2269, %v2268
      %v2281 = vpack.c.b16 %v2271, %v2270
      %v2282 = vpack.c.b16 %v2273, %v2272
      %v2283 = vpack.c.b16 %v2275, %v2274
      %v2284 = vpack.c.b16 %v2277, %v2276
      %v2285 = vpack.c.b16 %v2279, %v2278
      %v2293 = vsel %vm1894, %v2235, 0
      %v2296 = vsel %vm1894, %v2236, 0
      %2298 = vmatprep.subr.bf16.mxu0 0
      %2299 = vmatpush1.bf16.msra.mxu0 %v2280
      %2300 = vmatprep.subr.bf16.mxu0 0
      %2301 = vmatpush1.bf16.msra.mxu0 %v2281
      %2302 = vmatprep.subr.bf16.mxu0 0
      %2303 = vmatpush1.bf16.msra.mxu0 %v2282
      %2304 = vmatprep.subr.bf16.mxu0 0
      %2305 = vmatpush1.bf16.msra.mxu0 %v2283
      %2306 = vmatprep.subr.bf16.mxu0 0
      %2307 = vmatpush1.bf16.msra.mxu0 %v2284
      %2308 = vmatprep.subr.bf16.mxu0 0
      %2309 = vmatpush1.bf16.msra.mxu0 %v2285
      %2310 = vmatprep.subr.bf16.mxu0 0
      %2311 = vmatpush1.bf16.msra.mxu0 0
      %2312 = vmatprep.subr.bf16.mxu0 0
      %2313 = vmatpush1.bf16.msra.mxu0 0
      %2314 = vmatprep.subr.bf16.mxu0 0
      %2315 = vmatpush1.bf16.msra.mxu0 0
      %2316 = vmatprep.subr.bf16.mxu0 0
      %2317 = vmatpush1.bf16.msra.mxu0 0
      %2318 = vmatprep.subr.bf16.mxu0 0
      %2319 = vmatpush1.bf16.msra.mxu0 0
      %2320 = vmatprep.subr.bf16.mxu0 0
      %2321 = vmatpush1.bf16.msra.mxu0 0
      %2322 = vmatprep.subr.bf16.mxu0 0
      %2323 = vmatpush1.bf16.msra.mxu0 0
      %2324 = vmatprep.subr.bf16.mxu0 0
      %2325 = vmatpush1.bf16.msra.mxu0 0
      %2326 = vmatprep.subr.bf16.mxu0 0
      %2327 = vmatpush1.bf16.msra.mxu0 0
      %2328 = vmatprep.subr.bf16.mxu0 0
      %2329 = vmatpush1.bf16.msra.mxu0 0
      %2330 = vmatprep.mubr.bf16.mxu0 0
      %2331 = vmatmul.mubr.bf16.gmra.mrb[0].mxu0 %v2293
      %v2332 = vpop.f32.mrb[0].mxu0
      %v2333 = vadd.f32 %v2254, %v2332
      %v2334 = vpop.f32.mrb[0].mxu0
      %v2335 = vpop.f32.mrb[0].mxu0
      %v2336 = vadd.f32 %v2254, %v2335
      %v2337 = vpop.f32.mrb[0].mxu0
      %2338 = vmatprep.mubr.bf16.mxu0 0
      %2339 = vmatmul.mubr.bf16.gmra.mrb[0].mxu0 %v2296
      %v2340 = vpop.f32.mrb[0].mxu0
      %v2341 = vadd.f32 %v2254, %v2340
      %v2342 = vpop.f32.mrb[0].mxu0
      %v2343 = vpop.f32.mrb[0].mxu0
      %v2344 = vadd.f32 %v2254, %v2343
      %v2345 = vpop.f32.mrb[0].mxu0
      %2346 = vdwg.mxu0
      %2347 = vst [vmem:[%s537] sm:$0xff] %v2333
      %2348 = vst [vmem:[%s537 + $0x8] sm:$0xff] %v2336
      %2349 = vst [vmem:[%s537 + $0x10] sm:$0xff] %v2341
      %2350 = vst [vmem:[%s537 + $0x18] sm:$0xff] %v2344
      %s2351 = smul.u32 4, %s28
      %p2352 = scmp.lt.s32.totalorder %s2351, 7
      %s2353 = scalar_select %p2352, %s2351, 7
      %s2354 = smul.addr %s2353, 8
      %s2355 = scalar_lea.vmem %s15, %s2354
      %s2356 = smul.u32 4, %s28
      %p2357 = scmp.lt.s32.totalorder %s2356, 7
      %s2358 = scalar_select %p2357, %s2356, 7
      %s2359 = smul.addr %s2358, 8
      %s2360 = scalar_lea.vmem %s16, %s2359
      // Predicated region
      $region81: #{dfr_forward.1} parent=79 // pred_check
        %p2361 = pneg %p366
      $region82: #{dfr_forward.1} parent=79 // pred_check_branch
        %2363 = sbr.rel (%p2361) target = $region84
      $region83: #{dfr_forward.1} parent=79 // pred_region
        %s2364 = smul.u32 4, %s28
      $region84: #{dfr_forward.1} parent=79 // pred_fallthru
        _
      // Predicated region
      $region85: #{dfr_forward.1} parent=79 // pred_check
        %p2365 = pneg %p392
      $region86: #{dfr_forward.1} parent=79 // pred_check_branch
        %2367 = sbr.rel (%p2365) target = $region88
      $region87: #{dfr_forward.1} parent=79 // pred_region
        %s2368 = smul.u32 4, %s28
      $region88: #{dfr_forward.1} parent=79 // pred_fallthru
        _
    $region80: #{dfr_forward.1} parent=5 // pred_fallthru
      _
    %p2369 = scmp.le.s32.totalorder 2, %s23
    // Predicated region
    $region89: #{dfr_forward.1} parent=5 // pred_check
      %p2370 = pneg %p2369
    $region90: #{dfr_forward.1} parent=5 // pred_check_branch
      %2372 = sbr.rel (%p2370) target = $region92
    $region91: #{dfr_forward.1} parent=5 // pred_region
      %s2373 = ssub.s32 %s23, 2
      // Predicated region
      $region93: #{dfr_forward.1} parent=91 // pred_check
        %p2374 = pneg %p372
      $region94: #{dfr_forward.1} parent=91 // pred_check_branch
        %2376 = sbr.rel (%p2374) target = $region96
      $region95: #{dfr_forward.1} parent=91 // pred_region
        %s2377 = smul.u32 4, %s29
        %p2378 = scmp.lt.s32.totalorder %s2377, 7
        %s2379 = scalar_select %p2378, %s2377, 7
        %s2380 = smul.addr %s2379, 8
        %s2381 = scalar_lea.vmem %s15, %s2380
      $region96: #{dfr_forward.1} parent=91 // pred_fallthru
        _
      // Predicated region
      $region97: #{dfr_forward.1} parent=91 // pred_check
        %p2382 = pneg %p398
      $region98: #{dfr_forward.1} parent=91 // pred_check_branch
        %2384 = sbr.rel (%p2382) target = $region100
      $region99: #{dfr_forward.1} parent=91 // pred_region
        %s2385 = smul.u32 4, %s29
        %p2386 = scmp.lt.s32.totalorder %s2385, 7
        %s2387 = scalar_select %p2386, %s2385, 7
        %s2388 = smul.addr %s2387, 8
        %s2389 = scalar_lea.vmem %s16, %s2388
      $region100: #{dfr_forward.1} parent=91 // pred_fallthru
        _
    $region92: #{dfr_forward.1} parent=5 // pred_fallthru
      _
  $region6: #{dfr_forward.1} parent=0 // loop_footer
    %s27 = sadd.s32 1, %s23
  $region7: #{dfr_forward.1} parent=0 // loop_footer_branch
    %22 = sbr.rel target = $region3
  $region8: #{dfr_forward.1} parent=0 // loop_exit
    _

</llo_original>
